<compile_context>
chip_gen: v5e
topology: v5e:2x2
jax: 0.10.0
libtpu: 0.0.40
codegen_flags: <defaults>
</compile_context>

<pallas_src>
import jax
import jax.numpy as jnp
from jax.experimental import pallas as pl
from jax.experimental.pallas import tpu as pltpu


def _osem_update_kernel(x_ref, a_ref, y_ref, b_ref, o_ref, bp_acc, sens_acc):
    k = pl.program_id(0)

    @pl.when(k == 0)
    def _init():
        bp_acc[...] = jnp.zeros_like(bp_acc)
        sens_acc[...] = jnp.zeros_like(sens_acc)

    a = a_ref[...]          # (tm, N) row tile of A -- read from HBM once, used 3x
    x = x_ref[...]          # (B, N)  image(s), grid-invariant (stays resident in VMEM)

    # forward projection for this row tile: p = x @ A_tile^T -> (B, tm)
    p = jax.lax.dot_general(
        x, a,
        dimension_numbers=(((1,), (1,)), ((), ())),
        preferred_element_type=jnp.float32,
    )

    # Poisson ratio (padded rows have A == 0, y == 0, b == 1 -> ratio == 0, no NaN)
    ratio = y_ref[...] / (p + b_ref[...])                          # (B, tm)

    # back projection accumulation: bp += ratio @ A_tile -> (B, N)
    bp_acc[...] += jnp.dot(ratio.astype(a.dtype), a,
                           preferred_element_type=jnp.float32)

    # fused subset sensitivity: sens += A_tile^T @ 1 -> (1, N)
    sens_acc[...] += jnp.sum(a.astype(jnp.float32), axis=0, keepdims=True)

    @pl.when(k == pl.num_programs(0) - 1)
    def _finalize():
        sens = sens_acc[...]
        # nan_to_num(1/sens, posinf=0); sens >= 0 for a non-negative system matrix,
        # and this form also zeroes any NaN that 1/sens could produce.
        inv_sens = jnp.where(sens > 0, 1.0 / sens, 0.0)
        grad = bp_acc[...] - sens
        o_ref[...] = (x + x * inv_sens * grad).astype(o_ref.dtype)


def osem_update(x, A, y, b, *, tm=None, a_dtype=jnp.float32):
    """One OSEM update:  x <- x + x * inv_sens * (A^T(y/(Ax+b)) - sens).

    x: [B, 1, D, H, W] float image(s)   (the module uses B == 1)
    A: [M, N] subset system matrix, N = D*H*W
    y: [M] measured counts of the subset
    b: [M] additive contamination (scatter + randoms) of the subset
    a_dtype: storage dtype of A inside the kernel (jnp.bfloat16 halves HBM traffic
             on this bandwidth-bound kernel; accumulation always stays f32).
    """
    B, C, D, H, W = x.shape
    assert C == 1
    N = D * H * W
    M = A.shape[0]
    assert A.shape == (M, N)

    x_rows = x.reshape(B, N).astype(jnp.float32)
    A = A.astype(a_dtype)
    y = y.reshape(M).astype(jnp.float32)
    b = b.reshape(M).astype(jnp.float32)

    # ----- tile size over the M (projection-bin) axis ------------------------
    if tm is None:
        bytes_per = jnp.finfo(a_dtype).bits // 8
        # ~4 MiB per A tile (double-buffered by the pipeline); multiple of 256.
        tm = max(256, ((4 << 20) // (N * bytes_per)) // 256 * 256)
        tm = min(tm, pl.cdiv(M, 256) * 256)
    assert tm % 256 == 0, "tm must be a multiple of 256 (lane constraint on y/b tiles)"

    # ----- pad M so tm divides it; the padding is inert (ratio == 0) ---------
    M_pad = pl.cdiv(M, tm) * tm
    if M_pad != M:
        pad = M_pad - M
        A = jnp.pad(A, ((0, pad), (0, 0)))                 # zero rows -> sens += 0
        y = jnp.pad(y, (0, pad))                           # zero counts
        b = jnp.pad(b, (0, pad), constant_values=1.0)      # ratio = 0/(0+1) = 0

    y_row = y.reshape(1, M_pad)
    b_row = b.reshape(1, M_pad)

    grid = (M_pad // tm,)

    # TODO(synk): on v7x, split the M range across the 2 TensorCores (parallel
    # leading grid axis + partial-bp reduce epilogue) to use both HBM streams.
    out_rows = pl.pallas_call(
        _osem_update_kernel,
        out_shape=jax.ShapeDtypeStruct((B, N), jnp.float32),
        grid_spec=pltpu.PrefetchScalarGridSpec(
            num_scalar_prefetch=0,
            grid=grid,
            in_specs=[
                pl.BlockSpec((B, N), lambda k: (0, 0)),     # x (resident)
                pl.BlockSpec((tm, N), lambda k: (k, 0)),    # A row tile (streamed once)
                pl.BlockSpec((1, tm), lambda k: (0, k)),    # y tile
                pl.BlockSpec((1, tm), lambda k: (0, k)),    # b tile
            ],
            out_specs=pl.BlockSpec((B, N), lambda k: (0, 0)),
            scratch_shapes=[
                pltpu.VMEM((B, N), jnp.float32),            # bp accumulator
                pltpu.VMEM((1, N), jnp.float32),            # sens accumulator
            ],
        ),
        compiler_params=pltpu.CompilerParams(
            dimension_semantics=("arbitrary",),             # M is a reduction axis
            vmem_limit_bytes=48 << 20,   # > default scoped (16/32 MiB), < v7x physical
        ),
    )(x_rows, A, y_row, b_row)

    return out_rows.reshape(x.shape)


if __name__ == "__main__":
    key = jax.random.PRNGKey(0)
    k1, k2, k3, k4 = jax.random.split(key, 4)

    # small deterministic synthetic problem (module uses batch = 1, channel = 1)
    D, H, W = 4, 16, 16            # N = 1024 voxels
    N = D * H * W
    M = 500                        # projection bins in this subset (exercises padding)

    x = jax.random.uniform(k1, (1, 1, D, H, W), jnp.float32, 0.1, 1.0)
    A = jax.random.uniform(k2, (M, N), jnp.float32, 0.0, 1.0) / N
    y = jax.random.uniform(k3, (M,), jnp.float32, 0.0, 10.0)
    b = jax.random.uniform(k4, (M,), jnp.float32, 0.1, 0.5)

    out = osem_update(x, A, y, b, tm=256)      # tm=256 -> 2 grid steps (tests accumulation)
    out = jax.block_until_ready(out)

    # plain-JAX reference (mirrors OSEMUpdateLayer.forward + __init__ precompute)
    x_row = x.reshape(1, N)
    sens = jnp.sum(A, axis=0, keepdims=True)
    inv_sens = jnp.where(sens > 0, 1.0 / sens, 0.0)
    p = x_row @ A.T
    ratio = y.reshape(1, M) / (p + b.reshape(1, M))
    grad = ratio @ A - sens
    ref = (x_row + x_row * inv_sens * grad).reshape(x.shape)

    assert jnp.allclose(out, ref, rtol=2e-4, atol=1e-4), "mismatch vs reference"
    print("KERNEL_OK")
</pallas_src>

<mosaic_0001>
module attributes {stable_mosaic.version = 11 : i64} {
  func.func @_osem_update_kernel(%arg0: i32, %arg1: memref<1x1024xf32, #tpu.memory_space<vmem>>, %arg2: memref<256x1024xf32, #tpu.memory_space<vmem>>, %arg3: memref<1x256xf32, #tpu.memory_space<vmem>>, %arg4: memref<1x256xf32, #tpu.memory_space<vmem>>, %arg5: memref<1x1024xf32, #tpu.memory_space<vmem>>, %arg6: memref<1x1024xf32, #tpu.memory_space<vmem>>, %arg7: memref<1x1024xf32, #tpu.memory_space<vmem>>) attributes {dimension_semantics = [#tpu.dimension_semantics<arbitrary>], iteration_bounds = array<i64: 2>, scalar_prefetch = 0 : i64, scratch_operands = 2 : i64, tpu.core_type = #tpu.core_type<tc>, window_params = [{pipeline_mode = #tpu.pipeline_mode<synchronous>, transform_indices = @transform_0, window_bounds = array<i64: 1, 1024>}, {transform_indices = @transform_1, window_bounds = array<i64: 256, 1024>}, {transform_indices = @transform_2, window_bounds = array<i64: 1, 256>}, {transform_indices = @transform_3, window_bounds = array<i64: 1, 256>}, {pipeline_mode = #tpu.pipeline_mode<synchronous>, transform_indices = @transform_4, window_bounds = array<i64: 1, 1024>}]} {
    %c0_i32 = arith.constant 0 : i32
    %0 = arith.cmpi eq, %arg0, %c0_i32 : i32
    %1 = arith.extui %0 : i1 to i32
    %c0_i32_0 = arith.constant 0 : i32
    %2 = arith.cmpi ne, %1, %c0_i32_0 : i32
    scf.if %2 {
      %cst_19 = arith.constant 0.000000e+00 : f32
      %22 = vector.broadcast %cst_19 : f32 to vector<1x1024xf32>
      %c0_20 = arith.constant 0 : index
      %c0_21 = arith.constant 0 : index
      %23 = vector.load %arg6[%c0_20, %c0_21] : memref<1x1024xf32, #tpu.memory_space<vmem>>, vector<1x1024xf32>
      tpu.vector_store %arg6[%c0_20, %c0_21], %22 {strides = array<i32>} : memref<1x1024xf32, #tpu.memory_space<vmem>>, vector<1x1024xf32>,
      %cst_22 = arith.constant 0.000000e+00 : f32
      %24 = vector.broadcast %cst_22 : f32 to vector<1x1024xf32>
      %c0_23 = arith.constant 0 : index
      %c0_24 = arith.constant 0 : index
      %25 = vector.load %arg7[%c0_23, %c0_24] : memref<1x1024xf32, #tpu.memory_space<vmem>>, vector<1x1024xf32>
      tpu.vector_store %arg7[%c0_23, %c0_24], %24 {strides = array<i32>} : memref<1x1024xf32, #tpu.memory_space<vmem>>, vector<1x1024xf32>,
    } else {
    }
    %c0 = arith.constant 0 : index
    %c0_1 = arith.constant 0 : index
    %3 = vector.load %arg2[%c0, %c0_1] : memref<256x1024xf32, #tpu.memory_space<vmem>>, vector<256x1024xf32>
    %c0_2 = arith.constant 0 : index
    %c0_3 = arith.constant 0 : index
    %4 = vector.load %arg1[%c0_2, %c0_3] : memref<1x1024xf32, #tpu.memory_space<vmem>>, vector<1x1024xf32>
    %cst = arith.constant dense<0.000000e+00> : vector<1x256xf32>
    %5 = tpu.matmul %4, %3, %cst {dimension_numbers = #tpu.dot_dimension_numbers<[1], [1], [0], [0], [0, 0, 1, 0], [], []>} : vector<1x1024xf32>, vector<256x1024xf32>, vector<1x256xf32> -> vector<1x256xf32>
    %c0_4 = arith.constant 0 : index
    %c0_5 = arith.constant 0 : index
    %6 = vector.load %arg3[%c0_4, %c0_5] : memref<1x256xf32, #tpu.memory_space<vmem>>, vector<1x256xf32>
    %c0_6 = arith.constant 0 : index
    %c0_7 = arith.constant 0 : index
    %7 = vector.load %arg4[%c0_6, %c0_7] : memref<1x256xf32, #tpu.memory_space<vmem>>, vector<1x256xf32>
    %8 = arith.addf %5, %7 : vector<1x256xf32>
    %9 = arith.divf %6, %8 : vector<1x256xf32>
    %c0_8 = arith.constant 0 : index
    %c0_9 = arith.constant 0 : index
    %10 = vector.load %arg6[%c0_8, %c0_9] : memref<1x1024xf32, #tpu.memory_space<vmem>>, vector<1x1024xf32>
    %cst_10 = arith.constant dense<0.000000e+00> : vector<1x1024xf32>
    %11 = tpu.matmul %9, %3, %cst_10 {dimension_numbers = #tpu.dot_dimension_numbers<[1], [0], [0], [1], [0, 0, 1, 1], [], []>} : vector<1x256xf32>, vector<256x1024xf32>, vector<1x1024xf32> -> vector<1x1024xf32>
    %12 = arith.addf %10, %11 : vector<1x1024xf32>
    %c0_11 = arith.constant 0 : index
    %c0_12 = arith.constant 0 : index
    %13 = vector.load %arg6[%c0_11, %c0_12] : memref<1x1024xf32, #tpu.memory_space<vmem>>, vector<1x1024xf32>
    tpu.vector_store %arg6[%c0_11, %c0_12], %12 {strides = array<i32>} : memref<1x1024xf32, #tpu.memory_space<vmem>>, vector<1x1024xf32>,
    %c0_13 = arith.constant 0 : index
    %c0_14 = arith.constant 0 : index
    %14 = vector.load %arg7[%c0_13, %c0_14] : memref<1x1024xf32, #tpu.memory_space<vmem>>, vector<1x1024xf32>
    %cst_15 = arith.constant dense<0.000000e+00> : vector<1024xf32>
    %15 = vector.multi_reduction <add>, %3, %cst_15 [0] : vector<256x1024xf32> to vector<1024xf32>
    %16 = vector.shape_cast %15 : vector<1024xf32> to vector<1x1024xf32>
    %17 = arith.addf %14, %16 : vector<1x1024xf32>
    %c0_16 = arith.constant 0 : index
    %c0_17 = arith.constant 0 : index
    %18 = vector.load %arg7[%c0_16, %c0_17] : memref<1x1024xf32, #tpu.memory_space<vmem>>, vector<1x1024xf32>
    tpu.vector_store %arg7[%c0_16, %c0_17], %17 {strides = array<i32>} : memref<1x1024xf32, #tpu.memory_space<vmem>>, vector<1x1024xf32>,
    %c1_i32 = arith.constant 1 : i32
    %19 = arith.cmpi eq, %arg0, %c1_i32 : i32
    %20 = arith.extui %19 : i1 to i32
    %c0_i32_18 = arith.constant 0 : i32
    %21 = arith.cmpi ne, %20, %c0_i32_18 : i32
    scf.if %21 {
      %c0_19 = arith.constant 0 : index
      %c0_20 = arith.constant 0 : index
      %22 = vector.load %arg7[%c0_19, %c0_20] : memref<1x1024xf32, #tpu.memory_space<vmem>>, vector<1x1024xf32>
      %cst_21 = arith.constant 0.000000e+00 : f32
      %23 = vector.broadcast %cst_21 : f32 to vector<1x1024xf32>
      %24 = arith.cmpf ogt, %22, %23 : vector<1x1024xf32>
      %cst_22 = arith.constant 1.000000e+00 : f32
      %25 = vector.broadcast %cst_22 : f32 to vector<1x1024xf32>
      %26 = arith.divf %25, %22 : vector<1x1024xf32>
      %cst_23 = arith.constant 0.000000e+00 : f32
      %27 = vector.broadcast %cst_23 : f32 to vector<1x1024xf32>
      %28 = arith.select %24, %26, %27 : vector<1x1024xi1>, vector<1x1024xf32>
      %c0_24 = arith.constant 0 : index
      %c0_25 = arith.constant 0 : index
      %29 = vector.load %arg6[%c0_24, %c0_25] : memref<1x1024xf32, #tpu.memory_space<vmem>>, vector<1x1024xf32>
      %30 = arith.subf %29, %22 : vector<1x1024xf32>
      %31 = arith.mulf %4, %28 : vector<1x1024xf32>
      %32 = arith.mulf %31, %30 : vector<1x1024xf32>
      %33 = arith.addf %4, %32 : vector<1x1024xf32>
      %c0_26 = arith.constant 0 : index
      %c0_27 = arith.constant 0 : index
      %34 = vector.load %arg5[%c0_26, %c0_27] : memref<1x1024xf32, #tpu.memory_space<vmem>>, vector<1x1024xf32>
      tpu.vector_store %arg5[%c0_26, %c0_27], %33 {strides = array<i32>} : memref<1x1024xf32, #tpu.memory_space<vmem>>, vector<1x1024xf32>,
    } else {
    }
    return
  }
  func.func @transform_0(%arg0: i32) -> (i32, i32) {
    %c0_i32 = arith.constant 0 : i32
    %c0_i32_0 = arith.constant 0 : i32
    %c0_i32_1 = arith.constant 0 : i32
    return %c0_i32, %c0_i32_0 : i32, i32
  }
  func.func @transform_1(%arg0: i32) -> (i32, i32) {
    %c0_i32 = arith.constant 0 : i32
    %c0_i32_0 = arith.constant 0 : i32
    return %arg0, %c0_i32 : i32, i32
  }
  func.func @transform_2(%arg0: i32) -> (i32, i32) {
    %c0_i32 = arith.constant 0 : i32
    %c0_i32_0 = arith.constant 0 : i32
    return %c0_i32, %arg0 : i32, i32
  }
  func.func @transform_3(%arg0: i32) -> (i32, i32) {
    %c0_i32 = arith.constant 0 : i32
    %c0_i32_0 = arith.constant 0 : i32
    return %c0_i32, %arg0 : i32, i32
  }
  func.func @transform_4(%arg0: i32) -> (i32, i32) {
    %c0_i32 = arith.constant 0 : i32
    %c0_i32_0 = arith.constant 0 : i32
    %c0_i32_1 = arith.constant 0 : i32
    return %c0_i32, %c0_i32_0 : i32, i32
  }
}

</mosaic_0001>

<llo_original>
// kernel: tpu_custom_call.1
$region0: #{tpu_custom_call.1}
  #allocation0 [shape = 'u32[]', space=smem, size = 0x4, offset = 0x4, fixed_abs, tag = 'smem constant byte address 0x4 - core index']
  #allocation1 [shape = 'u32[72,128]{1,0:T(1,128)}', space=vmem, size = 0x9000, scoped, tag = 'internal scratch']
  #allocation2 [shape = 'f32[1,1024]{1,0:T(1,128)}', space=vmem, size = 0x1000, scoped, tag = 'scratch operand']
  #allocation3 [shape = 'f32[1,1024]{1,0:T(1,128)}', space=vmem, size = 0x1000, scoped, tag = 'scratch operand']
  %s0 = inlined_call_operand.hbm [shape: f32[1,1024], index: 0, kind: input, shape index: {}]
  %s1 = inlined_call_operand.hbm [shape: f32[512,1024], index: 1, kind: input, shape index: {}]
  %s2 = inlined_call_operand.hbm [shape: f32[1,512], index: 2, kind: input, shape index: {}]
  %s3 = inlined_call_operand.hbm [shape: f32[1,512], index: 3, kind: input, shape index: {}]
  %s4 = inlined_call_operand.hbm [shape: f32[1,1024], index: 4, kind: output, shape index: {}]
  %s5 = sld [smem:[#allocation0]]
  $region73: #{tpu_custom_call.1} parent=0
    _
  %s7 = ssub.s32 1, %s5
  %s8 = scalar_select 0, %s7, %s5
  $region1: #{tpu_custom_call.1} parent=0
    #allocation4 [shape = 'u8[4096]{0}', space=vmem, size = 0x1000, scoped, tag = 'input window, operand 0, single buffered']
    #allocation5 [shape = 's32[2]{0}', space=sflag, size = 0x8, scoped, tag = 'scoped memory for tpu_custom_call.1']
    #allocation6 [shape = 's32[2]{0}', space=sflag, size = 0x8, scoped, tag = 'scoped memory for tpu_custom_call.1']
    #allocation7 [shape = 'u8[2097152]{0}', space=vmem, size = 0x200000, scoped, tag = 'input window, operand 1']
    #allocation8 [shape = 's32[2]{0}', space=sflag, size = 0x8, scoped, tag = 'scoped memory for tpu_custom_call.1']
    #allocation9 [shape = 'u8[2048]{0}', space=vmem, size = 0x800, scoped, tag = 'input window, operand 2']
    #allocation10 [shape = 'u8[2048]{0}', space=vmem, size = 0x800, scoped, tag = 'input window, operand 3']
    #allocation11 [shape = 's32[2]{0}', space=sflag, size = 0x8, scoped, tag = 'scoped memory for tpu_custom_call.1']
    #allocation12 [shape = 'u8[4096]{0}', space=vmem, size = 0x1000, scoped, tag = 'output window, operand 0, single buffered']
    %9 = vsyncpa [#allocation5], 0
    %10 = vsyncpa [#allocation8], 0
    %s11 = scalar_lea.sflag [#allocation8], 1
    %12 = vsyncpa %s11, 0
    %13 = vsyncpa [#allocation11], 0
    %s14 = scalar_lea.sflag [#allocation11], 1
    %15 = vsyncpa %s14, 0
    %16 = vsyncpa [#allocation6], 0
    loop: start=0, step=1, limit=4
    $region2: #{tpu_custom_call.1} parent=1 // loop_pre_header
      _
    $region3: #{tpu_custom_call.1} parent=1 // loop_header
      %s18 = sphi 0, %s22
      %p19 = scmp.ge.s32.totalorder %s18, 4
      %s26 = sphi 0, %s26
      %s28 = sphi 0, %s26
      %s29 = sphi 0, %s28
      %s43 = sphi 0, %s29
      %s49 = sphi 0, %s51
      %s52 = sphi 0, %s49
      %s53 = sphi 0, %s52
      %s69 = sphi 0, %s53
      %s75 = sphi 0, %s77
      %s78 = sphi 0, %s75
      %s79 = sphi 0, %s78
      %s95 = sphi 0, %s79
      %s101 = sphi 0, %s103
      %s104 = sphi 0, %s101
      %s105 = sphi 0, %s104
      %s121 = sphi 0, %s105
      %s125 = sphi 0, %s125
      %s127 = sphi 0, %s125
      %s128 = sphi 0, %s127
      %s142 = sphi 0, %s128
    $region4: #{tpu_custom_call.1} parent=1 // loop_header_branch
      %21 = sbr.rel (%p19) target = $region8
    $region5: #{tpu_custom_call.1} parent=1 // loop_body
      %s23 = ssub.s32 %s18, 1
      %s24 = ssub.s32 %s18, 2
      %s25 = sadd.s32 %s18, 1
      %s27 = sadd.s32 %s26, 1
      %p30 = scmp.eq.s32.totalorder %s18, 1
      %p31 = scmp.ne.s32.totalorder %s26, %s28
      %p32 = scmp.eq.s32.totalorder %s18, 0
      %p33 = por %p31, %p32
      %p34 = scmp.ne.s32.totalorder %s26, %s28
      %p35 = scmp.eq.s32.totalorder %s23, 1
      %p36 = por %p34, %p35
      %p37 = scmp.ne.s32.totalorder %s28, %s29
      %p38 = scmp.eq.s32.totalorder %s23, 0
      %p39 = por %p37, %p38
      %p40 = scmp.ne.s32.totalorder %s28, %s29
      %p41 = scmp.eq.s32.totalorder %s24, 1
      %p42 = por %p40, %p41
      %p44 = scmp.ne.s32.totalorder %s29, %s43
      %p45 = scmp.eq.s32.totalorder %s24, 0
      %p46 = por %p44, %p45
      %s47 = ssub.s32 %s18, %s25
      %p48 = scmp.eq.s32.totalorder %s47, 0
      %s50 = sadd.s32 %s49, 1
      %s51 = scalar_select %p48, %s49, %s50
      %p54 = pneg %p48
      %p55 = scmp.eq.s32.totalorder %s18, 1
      %p56 = por %p54, %p55
      %p57 = scmp.ne.s32.totalorder %s49, %s52
      %p58 = scmp.eq.s32.totalorder %s18, 0
      %p59 = por %p57, %p58
      %p60 = scmp.ne.s32.totalorder %s49, %s52
      %p61 = scmp.eq.s32.totalorder %s23, 1
      %p62 = por %p60, %p61
      %p63 = scmp.ne.s32.totalorder %s52, %s53
      %p64 = scmp.eq.s32.totalorder %s23, 0
      %p65 = por %p63, %p64
      %p66 = scmp.ne.s32.totalorder %s52, %s53
      %p67 = scmp.eq.s32.totalorder %s24, 1
      %p68 = por %p66, %p67
      %p70 = scmp.ne.s32.totalorder %s53, %s69
      %p71 = scmp.eq.s32.totalorder %s24, 0
      %p72 = por %p70, %p71
      %s73 = ssub.s32 %s18, %s25
      %p74 = scmp.eq.s32.totalorder %s73, 0
      %s76 = sadd.s32 %s75, 1
      %s77 = scalar_select %p74, %s75, %s76
      %p80 = pneg %p74
      %p81 = scmp.eq.s32.totalorder %s18, 1
      %p82 = por %p80, %p81
      %p83 = scmp.ne.s32.totalorder %s75, %s78
      %p84 = scmp.eq.s32.totalorder %s18, 0
      %p85 = por %p83, %p84
      %p86 = scmp.ne.s32.totalorder %s75, %s78
      %p87 = scmp.eq.s32.totalorder %s23, 1
      %p88 = por %p86, %p87
      %p89 = scmp.ne.s32.totalorder %s78, %s79
      %p90 = scmp.eq.s32.totalorder %s23, 0
      %p91 = por %p89, %p90
      %p92 = scmp.ne.s32.totalorder %s78, %s79
      %p93 = scmp.eq.s32.totalorder %s24, 1
      %p94 = por %p92, %p93
      %p96 = scmp.ne.s32.totalorder %s79, %s95
      %p97 = scmp.eq.s32.totalorder %s24, 0
      %p98 = por %p96, %p97
      %s99 = ssub.s32 %s18, %s25
      %p100 = scmp.eq.s32.totalorder %s99, 0
      %s102 = sadd.s32 %s101, 1
      %s103 = scalar_select %p100, %s101, %s102
      %p106 = pneg %p100
      %p107 = scmp.eq.s32.totalorder %s18, 1
      %p108 = por %p106, %p107
      %p109 = scmp.ne.s32.totalorder %s101, %s104
      %p110 = scmp.eq.s32.totalorder %s18, 0
      %p111 = por %p109, %p110
      %p112 = scmp.ne.s32.totalorder %s101, %s104
      %p113 = scmp.eq.s32.totalorder %s23, 1
      %p114 = por %p112, %p113
      %p115 = scmp.ne.s32.totalorder %s104, %s105
      %p116 = scmp.eq.s32.totalorder %s23, 0
      %p117 = por %p115, %p116
      %p118 = scmp.ne.s32.totalorder %s104, %s105
      %p119 = scmp.eq.s32.totalorder %s24, 1
      %p120 = por %p118, %p119
      %p122 = scmp.ne.s32.totalorder %s105, %s121
      %p123 = scmp.eq.s32.totalorder %s24, 0
      %p124 = por %p122, %p123
      %s126 = sadd.s32 %s125, 1
      %p129 = scmp.eq.s32.totalorder %s18, 1
      %p130 = scmp.ne.s32.totalorder %s125, %s127
      %p131 = scmp.eq.s32.totalorder %s18, 0
      %p132 = por %p130, %p131
      %p133 = scmp.ne.s32.totalorder %s125, %s127
      %p134 = scmp.eq.s32.totalorder %s23, 1
      %p135 = por %p133, %p134
      %p136 = scmp.ne.s32.totalorder %s127, %s128
      %p137 = scmp.eq.s32.totalorder %s23, 0
      %p138 = por %p136, %p137
      %p139 = scmp.ne.s32.totalorder %s127, %s128
      %p140 = scmp.eq.s32.totalorder %s24, 1
      %p141 = por %p139, %p140
      %p143 = scmp.ne.s32.totalorder %s128, %s142
      %p144 = scmp.eq.s32.totalorder %s24, 0
      %p145 = por %p143, %p144
      %p146 = scmp.le.s32.totalorder 1, %s18
      %p147 = scmp.lt.s32.totalorder %s18, 3
      %p148 = pnand %p146, %p147
      %p149 = pneg %p148
      // Predicated region
      $region9: #{tpu_custom_call.1} parent=5 // pred_check
        _
      $region10: #{tpu_custom_call.1} parent=5 // pred_check_branch
        %151 = sbr.rel (%p148) target = $region12
      $region11: #{tpu_custom_call.1} parent=5 // pred_region
        %s152 = ssub.s32 %s18, 1
        // Predicated region
        $region13: #{tpu_custom_call.1} parent=11 // pred_check
          %p153 = pneg %p39
        $region14: #{tpu_custom_call.1} parent=11 // pred_check_branch
          %155 = sbr.rel (%p153) target = $region16
        $region15: #{tpu_custom_call.1} parent=11 // pred_region
          %157 = vsyncadd [#allocation5], 0
          %s159 = sshll.u32 %s0, 4
          %s160 = int_to_ptr.hbm [resolvable:$true] %s159
          %s161 = sshll.u32 [#allocation4], 4
          %s162 = int_to_ptr.vmem [resolvable:$true] %s161
          %164 = dma.hbm_to_vmem [thread:$0]  %s160, 128, %s162, [#allocation5]
        $region16: #{tpu_custom_call.1} parent=11 // pred_fallthru
          _
      $region12: #{tpu_custom_call.1} parent=5 // pred_fallthru
        _
      %p165 = scmp.lt.s32.totalorder %s18, 2
      // Predicated region
      $region17: #{tpu_custom_call.1} parent=5 // pred_check
        %p166 = pneg %p165
      $region18: #{tpu_custom_call.1} parent=5 // pred_check_branch
        %168 = sbr.rel (%p166) target = $region20
      $region19: #{tpu_custom_call.1} parent=5 // pred_region
        // Predicated region
        $region21: #{tpu_custom_call.1} parent=19 // pred_check
          %p169 = pneg %p59
        $region22: #{tpu_custom_call.1} parent=19 // pred_check_branch
          %171 = sbr.rel (%p169) target = $region24
        $region23: #{tpu_custom_call.1} parent=19 // pred_region
          %s172 = sand.u32 %s18, 1
          %s173 = scalar_lea.sflag [#allocation8], %s172
          %s174 = sand.u32 %s49, 1
          %s175 = smul.addr %s174, 2048
          %s176 = scalar_lea.vmem [#allocation7], %s175
          %s177 = smul.u32 32, %s18
          %179 = vsyncadd %s173, 0
          %s180 = smul.addr %s177, 8
          %s181 = smul.addr %s180, 8
          %s182 = scalar_lea.hbm %s1, %s181
          %s183 = sshll.u32 %s182, 4
          %s184 = int_to_ptr.hbm [resolvable:$true] %s183
          %s185 = sshll.u32 %s176, 4
          %s186 = int_to_ptr.vmem [resolvable:$true] %s185
          %191 = dma.hbm_to_vmem [thread:$0]  %s184, 32768, %s186, %s173, 1024, 1024, 64
        $region24: #{tpu_custom_call.1} parent=19 // pred_fallthru
          _
        // Predicated region
        $region25: #{tpu_custom_call.1} parent=19 // pred_check
          %p192 = pneg %p85
        $region26: #{tpu_custom_call.1} parent=19 // pred_check_branch
          %194 = sbr.rel (%p192) target = $region28
        $region27: #{tpu_custom_call.1} parent=19 // pred_region
          %s195 = sand.u32 %s18, 1
          %s196 = scalar_lea.sflag [#allocation8], %s195
          %s197 = sand.u32 %s75, 1
          %s198 = smul.addr %s197, 2
          %s199 = scalar_lea.vmem [#allocation9], %s198
          %s200 = smul.u32 2, %s18
          %202 = vsyncadd %s196, 0
          %s203 = scalar_lea.hbm %s2, %s200
          %s205 = sshll.u32 %s203, 4
          %s206 = int_to_ptr.hbm [resolvable:$true] %s205
          %s207 = sshll.u32 %s199, 4
          %s208 = int_to_ptr.vmem [resolvable:$true] %s207
          %210 = dma.hbm_to_vmem [thread:$0]  %s206, 32, %s208, %s196
        $region28: #{tpu_custom_call.1} parent=19 // pred_fallthru
          _
        // Predicated region
        $region29: #{tpu_custom_call.1} parent=19 // pred_check
          %p211 = pneg %p111
        $region30: #{tpu_custom_call.1} parent=19 // pred_check_branch
          %213 = sbr.rel (%p211) target = $region32
        $region31: #{tpu_custom_call.1} parent=19 // pred_region
          %s214 = sand.u32 %s101, 1
          %s215 = scalar_lea.sflag [#allocation11], %s214
          %s216 = sand.u32 %s101, 1
          %s217 = smul.addr %s216, 2
          %s218 = scalar_lea.vmem [#allocation10], %s217
          %s219 = smul.u32 2, %s18
          %221 = vsyncadd %s215, 0
          %s222 = scalar_lea.hbm %s3, %s219
          %s224 = sshll.u32 %s222, 4
          %s225 = int_to_ptr.hbm [resolvable:$true] %s224
          %s226 = sshll.u32 %s218, 4
          %s227 = int_to_ptr.vmem [resolvable:$true] %s226
          %229 = dma.hbm_to_vmem [thread:$0]  %s225, 32, %s227, %s215
        $region32: #{tpu_custom_call.1} parent=19 // pred_fallthru
          _
      $region20: #{tpu_custom_call.1} parent=5 // pred_fallthru
        _
      %p230 = scmp.le.s32.totalorder 1, %s18
      %p231 = scmp.lt.s32.totalorder %s18, 3
      %p232 = pnand %p230, %p231
      %p233 = pneg %p232
      // Predicated region
      $region33: #{tpu_custom_call.1} parent=5 // pred_check
        _
      $region34: #{tpu_custom_call.1} parent=5 // pred_check_branch
        %235 = sbr.rel (%p232) target = $region36
      $region35: #{tpu_custom_call.1} parent=5 // pred_region
        %s236 = ssub.s32 %s18, 1
        // Predicated region
        $region37: #{tpu_custom_call.1} parent=35 // pred_check
          %p237 = pneg %p39
        $region38: #{tpu_custom_call.1} parent=35 // pred_check_branch
          %239 = sbr.rel (%p237) target = $region40
        $region39: #{tpu_custom_call.1} parent=35 // pred_region
          %241 = dma.done [#allocation5], 128
        $region40: #{tpu_custom_call.1} parent=35 // pred_fallthru
          _
        %s242 = sand.u32 %s23, 1
        %s243 = scalar_lea.sflag [#allocation8], %s242
        %s244 = sand.u32 %s52, 1
        %s245 = smul.addr %s244, 2048
        %s246 = scalar_lea.vmem [#allocation7], %s245
        // Predicated region
        $region41: #{tpu_custom_call.1} parent=35 // pred_check
          %p247 = pneg %p65
        $region42: #{tpu_custom_call.1} parent=35 // pred_check_branch
          %249 = sbr.rel (%p247) target = $region44
        $region43: #{tpu_custom_call.1} parent=35 // pred_region
          %251 = dma.done %s243, 32768
        $region44: #{tpu_custom_call.1} parent=35 // pred_fallthru
          _
        %s252 = sand.u32 %s23, 1
        %s253 = scalar_lea.sflag [#allocation8], %s252
        %s254 = sand.u32 %s78, 1
        %s255 = smul.addr %s254, 2
        %s256 = scalar_lea.vmem [#allocation9], %s255
        // Predicated region
        $region45: #{tpu_custom_call.1} parent=35 // pred_check
          %p257 = pneg %p91
        $region46: #{tpu_custom_call.1} parent=35 // pred_check_branch
          %259 = sbr.rel (%p257) target = $region48
        $region47: #{tpu_custom_call.1} parent=35 // pred_region
          %261 = dma.done %s253, 32
        $region48: #{tpu_custom_call.1} parent=35 // pred_fallthru
          _
        %s262 = sand.u32 %s104, 1
        %s263 = scalar_lea.sflag [#allocation11], %s262
        %s264 = sand.u32 %s104, 1
        %s265 = smul.addr %s264, 2
        %s266 = scalar_lea.vmem [#allocation10], %s265
        // Predicated region
        $region49: #{tpu_custom_call.1} parent=35 // pred_check
          %p267 = pneg %p117
        $region50: #{tpu_custom_call.1} parent=35 // pred_check_branch
          %269 = sbr.rel (%p267) target = $region52
        $region51: #{tpu_custom_call.1} parent=35 // pred_region
          %271 = dma.done %s263, 32
        $region52: #{tpu_custom_call.1} parent=35 // pred_fallthru
          _
        %p272 = pneg %p39
        %p273 = pneg %p36
        %s274 = sand.u32 %s23, 1
        %s275 = scalar_lea.sflag [#allocation8], %s274
        %s276 = sand.u32 %s52, 1
        %s277 = smul.addr %s276, 2048
        %s278 = scalar_lea.vmem [#allocation7], %s277
        %p279 = pneg %p65
        %p280 = pneg %p62
        %s281 = sand.u32 %s23, 1
        %s282 = scalar_lea.sflag [#allocation8], %s281
        %s283 = sand.u32 %s78, 1
        %s284 = smul.addr %s283, 2
        %s285 = scalar_lea.vmem [#allocation9], %s284
        %p286 = pneg %p91
        %p287 = pneg %p88
        %s288 = sand.u32 %s104, 1
        %s289 = scalar_lea.sflag [#allocation11], %s288
        %s290 = sand.u32 %s104, 1
        %s291 = smul.addr %s290, 2
        %s292 = scalar_lea.vmem [#allocation10], %s291
        %p293 = pneg %p117
        %p294 = pneg %p114
        %p295 = pneg %p138
        %p296 = pneg %p135
        %s297 = smul.u32 32, %s23
        %s298 = smul.u32 2, %s23
        %s299 = smul.u32 2, %s23
        %p300 = scmp.eq.s32.totalorder %s23, 0
        // Predicated region
        $region53: #{tpu_custom_call.1} parent=35 // pred_check
          %p301 = pneg %p300
        $region54: #{tpu_custom_call.1} parent=35 // pred_check_branch
          %303 = sbr.rel (%p301) target = $region56
        $region55: #{tpu_custom_call.1} parent=35 // pred_region
          %304 = vst [vmem:[#allocation2] sm:$0xff] 0.0
          %305 = vst [vmem:[#allocation3] sm:$0xff] 0.0
        $region56: #{tpu_custom_call.1} parent=35 // pred_fallthru
          _
        %v306 = vld [vmem:[%s246] sm:$0xff]
        %v307 = vld [vmem:[%s246 + $0x8] sm:$0xff]
        %v308 = vld [vmem:[%s246 + $0x10] sm:$0xff]
        %v309 = vld [vmem:[%s246 + $0x18] sm:$0xff]
        %v310 = vld [vmem:[%s246 + $0x20] sm:$0xff]
        %v311 = vld [vmem:[%s246 + $0x28] sm:$0xff]
        %v312 = vld [vmem:[%s246 + $0x30] sm:$0xff]
        %v313 = vld [vmem:[%s246 + $0x38] sm:$0xff]
        %v314 = vld [vmem:[%s246 + $0x40] sm:$0xff]
        %v315 = vld [vmem:[%s246 + $0x48] sm:$0xff]
        %v316 = vld [vmem:[%s246 + $0x50] sm:$0xff]
        %v317 = vld [vmem:[%s246 + $0x58] sm:$0xff]
        %v318 = vld [vmem:[%s246 + $0x60] sm:$0xff]
        %v319 = vld [vmem:[%s246 + $0x68] sm:$0xff]
        %v320 = vld [vmem:[%s246 + $0x70] sm:$0xff]
        %v321 = vld [vmem:[%s246 + $0x78] sm:$0xff]
        %v322 = vld [vmem:[%s246 + $0x80] sm:$0xff]
        %v323 = vld [vmem:[%s246 + $0x88] sm:$0xff]
        %v324 = vld [vmem:[%s246 + $0x90] sm:$0xff]
        %v325 = vld [vmem:[%s246 + $0x98] sm:$0xff]
        %v326 = vld [vmem:[%s246 + $0xa0] sm:$0xff]
        %v327 = vld [vmem:[%s246 + $0xa8] sm:$0xff]
        %v328 = vld [vmem:[%s246 + $0xb0] sm:$0xff]
        %v329 = vld [vmem:[%s246 + $0xb8] sm:$0xff]
        %v330 = vld [vmem:[%s246 + $0xc0] sm:$0xff]
        %v331 = vld [vmem:[%s246 + $0xc8] sm:$0xff]
        %v332 = vld [vmem:[%s246 + $0xd0] sm:$0xff]
        %v333 = vld [vmem:[%s246 + $0xd8] sm:$0xff]
        %v334 = vld [vmem:[%s246 + $0xe0] sm:$0xff]
        %v335 = vld [vmem:[%s246 + $0xe8] sm:$0xff]
        %v336 = vld [vmem:[%s246 + $0xf0] sm:$0xff]
        %v337 = vld [vmem:[%s246 + $0xf8] sm:$0xff]
        %v338 = vld [vmem:[%s246 + $0x100] sm:$0xff]
        %v339 = vld [vmem:[%s246 + $0x108] sm:$0xff]
        %v340 = vld [vmem:[%s246 + $0x110] sm:$0xff]
        %v341 = vld [vmem:[%s246 + $0x118] sm:$0xff]
        %v342 = vld [vmem:[%s246 + $0x120] sm:$0xff]
        %v343 = vld [vmem:[%s246 + $0x128] sm:$0xff]
        %v344 = vld [vmem:[%s246 + $0x130] sm:$0xff]
        %v345 = vld [vmem:[%s246 + $0x138] sm:$0xff]
        %v346 = vld [vmem:[%s246 + $0x140] sm:$0xff]
        %v347 = vld [vmem:[%s246 + $0x148] sm:$0xff]
        %v348 = vld [vmem:[%s246 + $0x150] sm:$0xff]
        %v349 = vld [vmem:[%s246 + $0x158] sm:$0xff]
        %v350 = vld [vmem:[%s246 + $0x160] sm:$0xff]
        %v351 = vld [vmem:[%s246 + $0x168] sm:$0xff]
        %v352 = vld [vmem:[%s246 + $0x170] sm:$0xff]
        %v353 = vld [vmem:[%s246 + $0x178] sm:$0xff]
        %v354 = vld [vmem:[%s246 + $0x180] sm:$0xff]
        %v355 = vld [vmem:[%s246 + $0x188] sm:$0xff]
        %v356 = vld [vmem:[%s246 + $0x190] sm:$0xff]
        %v357 = vld [vmem:[%s246 + $0x198] sm:$0xff]
        %v358 = vld [vmem:[%s246 + $0x1a0] sm:$0xff]
        %v359 = vld [vmem:[%s246 + $0x1a8] sm:$0xff]
        %v360 = vld [vmem:[%s246 + $0x1b0] sm:$0xff]
        %v361 = vld [vmem:[%s246 + $0x1b8] sm:$0xff]
        %v362 = vld [vmem:[%s246 + $0x1c0] sm:$0xff]
        %v363 = vld [vmem:[%s246 + $0x1c8] sm:$0xff]
        %v364 = vld [vmem:[%s246 + $0x1d0] sm:$0xff]
        %v365 = vld [vmem:[%s246 + $0x1d8] sm:$0xff]
        %v366 = vld [vmem:[%s246 + $0x1e0] sm:$0xff]
        %v367 = vld [vmem:[%s246 + $0x1e8] sm:$0xff]
        %v368 = vld [vmem:[%s246 + $0x1f0] sm:$0xff]
        %v369 = vld [vmem:[%s246 + $0x1f8] sm:$0xff]
        %v370 = vld [vmem:[%s246 + $0x200] sm:$0xff]
        %v371 = vld [vmem:[%s246 + $0x208] sm:$0xff]
        %v372 = vld [vmem:[%s246 + $0x210] sm:$0xff]
        %v373 = vld [vmem:[%s246 + $0x218] sm:$0xff]
        %v374 = vld [vmem:[%s246 + $0x220] sm:$0xff]
        %v375 = vld [vmem:[%s246 + $0x228] sm:$0xff]
        %v376 = vld [vmem:[%s246 + $0x230] sm:$0xff]
        %v377 = vld [vmem:[%s246 + $0x238] sm:$0xff]
        %v378 = vld [vmem:[%s246 + $0x240] sm:$0xff]
        %v379 = vld [vmem:[%s246 + $0x248] sm:$0xff]
        %v380 = vld [vmem:[%s246 + $0x250] sm:$0xff]
        %v381 = vld [vmem:[%s246 + $0x258] sm:$0xff]
        %v382 = vld [vmem:[%s246 + $0x260] sm:$0xff]
        %v383 = vld [vmem:[%s246 + $0x268] sm:$0xff]
        %v384 = vld [vmem:[%s246 + $0x270] sm:$0xff]
        %v385 = vld [vmem:[%s246 + $0x278] sm:$0xff]
        %v386 = vld [vmem:[%s246 + $0x280] sm:$0xff]
        %v387 = vld [vmem:[%s246 + $0x288] sm:$0xff]
        %v388 = vld [vmem:[%s246 + $0x290] sm:$0xff]
        %v389 = vld [vmem:[%s246 + $0x298] sm:$0xff]
        %v390 = vld [vmem:[%s246 + $0x2a0] sm:$0xff]
        %v391 = vld [vmem:[%s246 + $0x2a8] sm:$0xff]
        %v392 = vld [vmem:[%s246 + $0x2b0] sm:$0xff]
        %v393 = vld [vmem:[%s246 + $0x2b8] sm:$0xff]
        %v394 = vld [vmem:[%s246 + $0x2c0] sm:$0xff]
        %v395 = vld [vmem:[%s246 + $0x2c8] sm:$0xff]
        %v396 = vld [vmem:[%s246 + $0x2d0] sm:$0xff]
        %v397 = vld [vmem:[%s246 + $0x2d8] sm:$0xff]
        %v398 = vld [vmem:[%s246 + $0x2e0] sm:$0xff]
        %v399 = vld [vmem:[%s246 + $0x2e8] sm:$0xff]
        %v400 = vld [vmem:[%s246 + $0x2f0] sm:$0xff]
        %v401 = vld [vmem:[%s246 + $0x2f8] sm:$0xff]
        %v402 = vld [vmem:[%s246 + $0x300] sm:$0xff]
        %v403 = vld [vmem:[%s246 + $0x308] sm:$0xff]
        %v404 = vld [vmem:[%s246 + $0x310] sm:$0xff]
        %v405 = vld [vmem:[%s246 + $0x318] sm:$0xff]
        %v406 = vld [vmem:[%s246 + $0x320] sm:$0xff]
        %v407 = vld [vmem:[%s246 + $0x328] sm:$0xff]
        %v408 = vld [vmem:[%s246 + $0x330] sm:$0xff]
        %v409 = vld [vmem:[%s246 + $0x338] sm:$0xff]
        %v410 = vld [vmem:[%s246 + $0x340] sm:$0xff]
        %v411 = vld [vmem:[%s246 + $0x348] sm:$0xff]
        %v412 = vld [vmem:[%s246 + $0x350] sm:$0xff]
        %v413 = vld [vmem:[%s246 + $0x358] sm:$0xff]
        %v414 = vld [vmem:[%s246 + $0x360] sm:$0xff]
        %v415 = vld [vmem:[%s246 + $0x368] sm:$0xff]
        %v416 = vld [vmem:[%s246 + $0x370] sm:$0xff]
        %v417 = vld [vmem:[%s246 + $0x378] sm:$0xff]
        %v418 = vld [vmem:[%s246 + $0x380] sm:$0xff]
        %v419 = vld [vmem:[%s246 + $0x388] sm:$0xff]
        %v420 = vld [vmem:[%s246 + $0x390] sm:$0xff]
        %v421 = vld [vmem:[%s246 + $0x398] sm:$0xff]
        %v422 = vld [vmem:[%s246 + $0x3a0] sm:$0xff]
        %v423 = vld [vmem:[%s246 + $0x3a8] sm:$0xff]
        %v424 = vld [vmem:[%s246 + $0x3b0] sm:$0xff]
        %v425 = vld [vmem:[%s246 + $0x3b8] sm:$0xff]
        %v426 = vld [vmem:[%s246 + $0x3c0] sm:$0xff]
        %v427 = vld [vmem:[%s246 + $0x3c8] sm:$0xff]
        %v428 = vld [vmem:[%s246 + $0x3d0] sm:$0xff]
        %v429 = vld [vmem:[%s246 + $0x3d8] sm:$0xff]
        %v430 = vld [vmem:[%s246 + $0x3e0] sm:$0xff]
        %v431 = vld [vmem:[%s246 + $0x3e8] sm:$0xff]
        %v432 = vld [vmem:[%s246 + $0x3f0] sm:$0xff]
        %v433 = vld [vmem:[%s246 + $0x3f8] sm:$0xff]
        %v434 = vld [vmem:[%s246 + $0x400] sm:$0xff]
        %v435 = vld [vmem:[%s246 + $0x408] sm:$0xff]
        %v436 = vld [vmem:[%s246 + $0x410] sm:$0xff]
        %v437 = vld [vmem:[%s246 + $0x418] sm:$0xff]
        %v438 = vld [vmem:[%s246 + $0x420] sm:$0xff]
        %v439 = vld [vmem:[%s246 + $0x428] sm:$0xff]
        %v440 = vld [vmem:[%s246 + $0x430] sm:$0xff]
        %v441 = vld [vmem:[%s246 + $0x438] sm:$0xff]
        %v442 = vld [vmem:[%s246 + $0x440] sm:$0xff]
        %v443 = vld [vmem:[%s246 + $0x448] sm:$0xff]
        %v444 = vld [vmem:[%s246 + $0x450] sm:$0xff]
        %v445 = vld [vmem:[%s246 + $0x458] sm:$0xff]
        %v446 = vld [vmem:[%s246 + $0x460] sm:$0xff]
        %v447 = vld [vmem:[%s246 + $0x468] sm:$0xff]
        %v448 = vld [vmem:[%s246 + $0x470] sm:$0xff]
        %v449 = vld [vmem:[%s246 + $0x478] sm:$0xff]
        %v450 = vld [vmem:[%s246 + $0x480] sm:$0xff]
        %v451 = vld [vmem:[%s246 + $0x488] sm:$0xff]
        %v452 = vld [vmem:[%s246 + $0x490] sm:$0xff]
        %v453 = vld [vmem:[%s246 + $0x498] sm:$0xff]
        %v454 = vld [vmem:[%s246 + $0x4a0] sm:$0xff]
        %v455 = vld [vmem:[%s246 + $0x4a8] sm:$0xff]
        %v456 = vld [vmem:[%s246 + $0x4b0] sm:$0xff]
        %v457 = vld [vmem:[%s246 + $0x4b8] sm:$0xff]
        %v458 = vld [vmem:[%s246 + $0x4c0] sm:$0xff]
        %v459 = vld [vmem:[%s246 + $0x4c8] sm:$0xff]
        %v460 = vld [vmem:[%s246 + $0x4d0] sm:$0xff]
        %v461 = vld [vmem:[%s246 + $0x4d8] sm:$0xff]
        %v462 = vld [vmem:[%s246 + $0x4e0] sm:$0xff]
        %v463 = vld [vmem:[%s246 + $0x4e8] sm:$0xff]
        %v464 = vld [vmem:[%s246 + $0x4f0] sm:$0xff]
        %v465 = vld [vmem:[%s246 + $0x4f8] sm:$0xff]
        %v466 = vld [vmem:[%s246 + $0x500] sm:$0xff]
        %v467 = vld [vmem:[%s246 + $0x508] sm:$0xff]
        %v468 = vld [vmem:[%s246 + $0x510] sm:$0xff]
        %v469 = vld [vmem:[%s246 + $0x518] sm:$0xff]
        %v470 = vld [vmem:[%s246 + $0x520] sm:$0xff]
        %v471 = vld [vmem:[%s246 + $0x528] sm:$0xff]
        %v472 = vld [vmem:[%s246 + $0x530] sm:$0xff]
        %v473 = vld [vmem:[%s246 + $0x538] sm:$0xff]
        %v474 = vld [vmem:[%s246 + $0x540] sm:$0xff]
        %v475 = vld [vmem:[%s246 + $0x548] sm:$0xff]
        %v476 = vld [vmem:[%s246 + $0x550] sm:$0xff]
        %v477 = vld [vmem:[%s246 + $0x558] sm:$0xff]
        %v478 = vld [vmem:[%s246 + $0x560] sm:$0xff]
        %v479 = vld [vmem:[%s246 + $0x568] sm:$0xff]
        %v480 = vld [vmem:[%s246 + $0x570] sm:$0xff]
        %v481 = vld [vmem:[%s246 + $0x578] sm:$0xff]
        %v482 = vld [vmem:[%s246 + $0x580] sm:$0xff]
        %v483 = vld [vmem:[%s246 + $0x588] sm:$0xff]
        %v484 = vld [vmem:[%s246 + $0x590] sm:$0xff]
        %v485 = vld [vmem:[%s246 + $0x598] sm:$0xff]
        %v486 = vld [vmem:[%s246 + $0x5a0] sm:$0xff]
        %v487 = vld [vmem:[%s246 + $0x5a8] sm:$0xff]
        %v488 = vld [vmem:[%s246 + $0x5b0] sm:$0xff]
        %v489 = vld [vmem:[%s246 + $0x5b8] sm:$0xff]
        %v490 = vld [vmem:[%s246 + $0x5c0] sm:$0xff]
        %v491 = vld [vmem:[%s246 + $0x5c8] sm:$0xff]
        %v492 = vld [vmem:[%s246 + $0x5d0] sm:$0xff]
        %v493 = vld [vmem:[%s246 + $0x5d8] sm:$0xff]
        %v494 = vld [vmem:[%s246 + $0x5e0] sm:$0xff]
        %v495 = vld [vmem:[%s246 + $0x5e8] sm:$0xff]
        %v496 = vld [vmem:[%s246 + $0x5f0] sm:$0xff]
        %v497 = vld [vmem:[%s246 + $0x5f8] sm:$0xff]
        %v498 = vld [vmem:[%s246 + $0x600] sm:$0xff]
        %v499 = vld [vmem:[%s246 + $0x608] sm:$0xff]
        %v500 = vld [vmem:[%s246 + $0x610] sm:$0xff]
        %v501 = vld [vmem:[%s246 + $0x618] sm:$0xff]
        %v502 = vld [vmem:[%s246 + $0x620] sm:$0xff]
        %v503 = vld [vmem:[%s246 + $0x628] sm:$0xff]
        %v504 = vld [vmem:[%s246 + $0x630] sm:$0xff]
        %v505 = vld [vmem:[%s246 + $0x638] sm:$0xff]
        %v506 = vld [vmem:[%s246 + $0x640] sm:$0xff]
        %v507 = vld [vmem:[%s246 + $0x648] sm:$0xff]
        %v508 = vld [vmem:[%s246 + $0x650] sm:$0xff]
        %v509 = vld [vmem:[%s246 + $0x658] sm:$0xff]
        %v510 = vld [vmem:[%s246 + $0x660] sm:$0xff]
        %v511 = vld [vmem:[%s246 + $0x668] sm:$0xff]
        %v512 = vld [vmem:[%s246 + $0x670] sm:$0xff]
        %v513 = vld [vmem:[%s246 + $0x678] sm:$0xff]
        %v514 = vld [vmem:[%s246 + $0x680] sm:$0xff]
        %v515 = vld [vmem:[%s246 + $0x688] sm:$0xff]
        %v516 = vld [vmem:[%s246 + $0x690] sm:$0xff]
        %v517 = vld [vmem:[%s246 + $0x698] sm:$0xff]
        %v518 = vld [vmem:[%s246 + $0x6a0] sm:$0xff]
        %v519 = vld [vmem:[%s246 + $0x6a8] sm:$0xff]
        %v520 = vld [vmem:[%s246 + $0x6b0] sm:$0xff]
        %v521 = vld [vmem:[%s246 + $0x6b8] sm:$0xff]
        %v522 = vld [vmem:[%s246 + $0x6c0] sm:$0xff]
        %v523 = vld [vmem:[%s246 + $0x6c8] sm:$0xff]
        %v524 = vld [vmem:[%s246 + $0x6d0] sm:$0xff]
        %v525 = vld [vmem:[%s246 + $0x6d8] sm:$0xff]
        %v526 = vld [vmem:[%s246 + $0x6e0] sm:$0xff]
        %v527 = vld [vmem:[%s246 + $0x6e8] sm:$0xff]
        %v528 = vld [vmem:[%s246 + $0x6f0] sm:$0xff]
        %v529 = vld [vmem:[%s246 + $0x6f8] sm:$0xff]
        %v530 = vld [vmem:[%s246 + $0x700] sm:$0xff]
        %v531 = vld [vmem:[%s246 + $0x708] sm:$0xff]
        %v532 = vld [vmem:[%s246 + $0x710] sm:$0xff]
        %v533 = vld [vmem:[%s246 + $0x718] sm:$0xff]
        %v534 = vld [vmem:[%s246 + $0x720] sm:$0xff]
        %v535 = vld [vmem:[%s246 + $0x728] sm:$0xff]
        %v536 = vld [vmem:[%s246 + $0x730] sm:$0xff]
        %v537 = vld [vmem:[%s246 + $0x738] sm:$0xff]
        %v538 = vld [vmem:[%s246 + $0x740] sm:$0xff]
        %v539 = vld [vmem:[%s246 + $0x748] sm:$0xff]
        %v540 = vld [vmem:[%s246 + $0x750] sm:$0xff]
        %v541 = vld [vmem:[%s246 + $0x758] sm:$0xff]
        %v542 = vld [vmem:[%s246 + $0x760] sm:$0xff]
        %v543 = vld [vmem:[%s246 + $0x768] sm:$0xff]
        %v544 = vld [vmem:[%s246 + $0x770] sm:$0xff]
        %v545 = vld [vmem:[%s246 + $0x778] sm:$0xff]
        %v546 = vld [vmem:[%s246 + $0x780] sm:$0xff]
        %v547 = vld [vmem:[%s246 + $0x788] sm:$0xff]
        %v548 = vld [vmem:[%s246 + $0x790] sm:$0xff]
        %v549 = vld [vmem:[%s246 + $0x798] sm:$0xff]
        %v550 = vld [vmem:[%s246 + $0x7a0] sm:$0xff]
        %v551 = vld [vmem:[%s246 + $0x7a8] sm:$0xff]
        %v552 = vld [vmem:[%s246 + $0x7b0] sm:$0xff]
        %v553 = vld [vmem:[%s246 + $0x7b8] sm:$0xff]
        %v554 = vld [vmem:[%s246 + $0x7c0] sm:$0xff]
        %v555 = vld [vmem:[%s246 + $0x7c8] sm:$0xff]
        %v556 = vld [vmem:[%s246 + $0x7d0] sm:$0xff]
        %v557 = vld [vmem:[%s246 + $0x7d8] sm:$0xff]
        %v558 = vld [vmem:[%s246 + $0x7e0] sm:$0xff]
        %v559 = vld [vmem:[%s246 + $0x7e8] sm:$0xff]
        %v560 = vld [vmem:[%s246 + $0x7f0] sm:$0xff]
        %v561 = vld [vmem:[%s246 + $0x7f8] sm:$0xff]
        %v562 = vld [vmem:[#allocation4] sm:$0xff]
        %v563 = vld [vmem:[%s256] sm:$0x3]
        %v564 = vld [vmem:[%s266] sm:$0x3]
        %v566 = vperm.slane %v562, 0
        %v567 = vperm.slane %v562, 1
        %v568 = vperm.slane %v562, 2
        %v569 = vperm.slane %v562, 3
        %v570 = vperm.slane %v562, 4
        %v571 = vperm.slane %v562, 5
        %v572 = vperm.slane %v562, 6
        %v573 = vperm.slane %v562, 7
        %v583 = vperm.slane %v564, 0
        %v584 = vperm.slane %v564, 1
        %587 = vmatpush.xpose.msra.mxu0 %v426
        %588 = vmatpush.xpose.msra.mxu0 %v418
        %589 = vmatpush.xpose.msra.mxu0 %v410
        %590 = vmatpush.xpose.msra.mxu0 %v402
        %591 = vmatpush.xpose.msra.mxu0 %v394
        %592 = vmatpush.xpose.msra.mxu0 %v386
        %593 = vmatpush.xpose.msra.mxu0 %v378
        %594 = vmatpush.xpose.msra.mxu0 %v370
        %595 = vmatpush.xpose.msra.mxu0 %v362
        %596 = vmatpush.xpose.msra.mxu0 %v354
        %597 = vmatpush.xpose.msra.mxu0 %v346
        %598 = vmatpush.xpose.msra.mxu0 %v338
        %599 = vmatpush.xpose.msra.mxu0 %v330
        %600 = vmatpush.xpose.msra.mxu0 %v322
        %601 = vmatpush.xpose.msra.mxu0 %v314
        %602 = vmatpush.xpose.msra.mxu0 %v306
        %603 = vmatmul.f32.gmra.mxu0 %v566
        %v604 = vpop.f32.mrf.mxu0
        %v605 = vadd.f32 %v583, %v604
        %606 = vdwg.mxu0
        %607 = vmatpush.xpose.msra.mxu0 %v427
        %608 = vmatpush.xpose.msra.mxu0 %v419
        %609 = vmatpush.xpose.msra.mxu0 %v411
        %610 = vmatpush.xpose.msra.mxu0 %v403
        %611 = vmatpush.xpose.msra.mxu0 %v395
        %612 = vmatpush.xpose.msra.mxu0 %v387
        %613 = vmatpush.xpose.msra.mxu0 %v379
        %614 = vmatpush.xpose.msra.mxu0 %v371
        %615 = vmatpush.xpose.msra.mxu0 %v363
        %616 = vmatpush.xpose.msra.mxu0 %v355
        %617 = vmatpush.xpose.msra.mxu0 %v347
        %618 = vmatpush.xpose.msra.mxu0 %v339
        %619 = vmatpush.xpose.msra.mxu0 %v331
        %620 = vmatpush.xpose.msra.mxu0 %v323
        %621 = vmatpush.xpose.msra.mxu0 %v315
        %622 = vmatpush.xpose.msra.mxu0 %v307
        %623 = vmatmul.f32.gmra.mxu0 %v567
        %v624 = vpop.f32.mrf.mxu0
        %v625 = vadd.f32 %v605, %v624
        %626 = vdwg.mxu0
        %627 = vmatpush.xpose.msra.mxu0 %v428
        %628 = vmatpush.xpose.msra.mxu0 %v420
        %629 = vmatpush.xpose.msra.mxu0 %v412
        %630 = vmatpush.xpose.msra.mxu0 %v404
        %631 = vmatpush.xpose.msra.mxu0 %v396
        %632 = vmatpush.xpose.msra.mxu0 %v388
        %633 = vmatpush.xpose.msra.mxu0 %v380
        %634 = vmatpush.xpose.msra.mxu0 %v372
        %635 = vmatpush.xpose.msra.mxu0 %v364
        %636 = vmatpush.xpose.msra.mxu0 %v356
        %637 = vmatpush.xpose.msra.mxu0 %v348
        %638 = vmatpush.xpose.msra.mxu0 %v340
        %639 = vmatpush.xpose.msra.mxu0 %v332
        %640 = vmatpush.xpose.msra.mxu0 %v324
        %641 = vmatpush.xpose.msra.mxu0 %v316
        %642 = vmatpush.xpose.msra.mxu0 %v308
        %643 = vmatmul.f32.gmra.mxu0 %v568
        %v644 = vpop.f32.mrf.mxu0
        %v645 = vadd.f32 %v625, %v644
        %646 = vdwg.mxu0
        %647 = vmatpush.xpose.msra.mxu0 %v429
        %648 = vmatpush.xpose.msra.mxu0 %v421
        %649 = vmatpush.xpose.msra.mxu0 %v413
        %650 = vmatpush.xpose.msra.mxu0 %v405
        %651 = vmatpush.xpose.msra.mxu0 %v397
        %652 = vmatpush.xpose.msra.mxu0 %v389
        %653 = vmatpush.xpose.msra.mxu0 %v381
        %654 = vmatpush.xpose.msra.mxu0 %v373
        %655 = vmatpush.xpose.msra.mxu0 %v365
        %656 = vmatpush.xpose.msra.mxu0 %v357
        %657 = vmatpush.xpose.msra.mxu0 %v349
        %658 = vmatpush.xpose.msra.mxu0 %v341
        %659 = vmatpush.xpose.msra.mxu0 %v333
        %660 = vmatpush.xpose.msra.mxu0 %v325
        %661 = vmatpush.xpose.msra.mxu0 %v317
        %662 = vmatpush.xpose.msra.mxu0 %v309
        %663 = vmatmul.f32.gmra.mxu0 %v569
        %v664 = vpop.f32.mrf.mxu0
        %v665 = vadd.f32 %v645, %v664
        %666 = vdwg.mxu0
        %667 = vmatpush.xpose.msra.mxu0 %v430
        %668 = vmatpush.xpose.msra.mxu0 %v422
        %669 = vmatpush.xpose.msra.mxu0 %v414
        %670 = vmatpush.xpose.msra.mxu0 %v406
        %671 = vmatpush.xpose.msra.mxu0 %v398
        %672 = vmatpush.xpose.msra.mxu0 %v390
        %673 = vmatpush.xpose.msra.mxu0 %v382
        %674 = vmatpush.xpose.msra.mxu0 %v374
        %675 = vmatpush.xpose.msra.mxu0 %v366
        %676 = vmatpush.xpose.msra.mxu0 %v358
        %677 = vmatpush.xpose.msra.mxu0 %v350
        %678 = vmatpush.xpose.msra.mxu0 %v342
        %679 = vmatpush.xpose.msra.mxu0 %v334
        %680 = vmatpush.xpose.msra.mxu0 %v326
        %681 = vmatpush.xpose.msra.mxu0 %v318
        %682 = vmatpush.xpose.msra.mxu0 %v310
        %683 = vmatmul.f32.gmra.mxu0 %v570
        %v684 = vpop.f32.mrf.mxu0
        %v685 = vadd.f32 %v665, %v684
        %686 = vdwg.mxu0
        %687 = vmatpush.xpose.msra.mxu0 %v431
        %688 = vmatpush.xpose.msra.mxu0 %v423
        %689 = vmatpush.xpose.msra.mxu0 %v415
        %690 = vmatpush.xpose.msra.mxu0 %v407
        %691 = vmatpush.xpose.msra.mxu0 %v399
        %692 = vmatpush.xpose.msra.mxu0 %v391
        %693 = vmatpush.xpose.msra.mxu0 %v383
        %694 = vmatpush.xpose.msra.mxu0 %v375
        %695 = vmatpush.xpose.msra.mxu0 %v367
        %696 = vmatpush.xpose.msra.mxu0 %v359
        %697 = vmatpush.xpose.msra.mxu0 %v351
        %698 = vmatpush.xpose.msra.mxu0 %v343
        %699 = vmatpush.xpose.msra.mxu0 %v335
        %700 = vmatpush.xpose.msra.mxu0 %v327
        %701 = vmatpush.xpose.msra.mxu0 %v319
        %702 = vmatpush.xpose.msra.mxu0 %v311
        %703 = vmatmul.f32.gmra.mxu0 %v571
        %v704 = vpop.f32.mrf.mxu0
        %v705 = vadd.f32 %v685, %v704
        %706 = vdwg.mxu0
        %707 = vmatpush.xpose.msra.mxu0 %v432
        %708 = vmatpush.xpose.msra.mxu0 %v424
        %709 = vmatpush.xpose.msra.mxu0 %v416
        %710 = vmatpush.xpose.msra.mxu0 %v408
        %711 = vmatpush.xpose.msra.mxu0 %v400
        %712 = vmatpush.xpose.msra.mxu0 %v392
        %713 = vmatpush.xpose.msra.mxu0 %v384
        %714 = vmatpush.xpose.msra.mxu0 %v376
        %715 = vmatpush.xpose.msra.mxu0 %v368
        %716 = vmatpush.xpose.msra.mxu0 %v360
        %717 = vmatpush.xpose.msra.mxu0 %v352
        %718 = vmatpush.xpose.msra.mxu0 %v344
        %719 = vmatpush.xpose.msra.mxu0 %v336
        %720 = vmatpush.xpose.msra.mxu0 %v328
        %721 = vmatpush.xpose.msra.mxu0 %v320
        %722 = vmatpush.xpose.msra.mxu0 %v312
        %723 = vmatmul.f32.gmra.mxu0 %v572
        %v724 = vpop.f32.mrf.mxu0
        %v725 = vadd.f32 %v705, %v724
        %726 = vdwg.mxu0
        %727 = vmatpush.xpose.msra.mxu0 %v433
        %728 = vmatpush.xpose.msra.mxu0 %v425
        %729 = vmatpush.xpose.msra.mxu0 %v417
        %730 = vmatpush.xpose.msra.mxu0 %v409
        %731 = vmatpush.xpose.msra.mxu0 %v401
        %732 = vmatpush.xpose.msra.mxu0 %v393
        %733 = vmatpush.xpose.msra.mxu0 %v385
        %734 = vmatpush.xpose.msra.mxu0 %v377
        %735 = vmatpush.xpose.msra.mxu0 %v369
        %736 = vmatpush.xpose.msra.mxu0 %v361
        %737 = vmatpush.xpose.msra.mxu0 %v353
        %738 = vmatpush.xpose.msra.mxu0 %v345
        %739 = vmatpush.xpose.msra.mxu0 %v337
        %740 = vmatpush.xpose.msra.mxu0 %v329
        %741 = vmatpush.xpose.msra.mxu0 %v321
        %742 = vmatpush.xpose.msra.mxu0 %v313
        %743 = vmatmul.f32.gmra.mxu0 %v573
        %v744 = vpop.f32.mrf.mxu0
        %v745 = vadd.f32 %v725, %v744
        %746 = vdwg.mxu0
        %747 = vmatpush.xpose.msra.mxu0 %v554
        %748 = vmatpush.xpose.msra.mxu0 %v546
        %749 = vmatpush.xpose.msra.mxu0 %v538
        %750 = vmatpush.xpose.msra.mxu0 %v530
        %751 = vmatpush.xpose.msra.mxu0 %v522
        %752 = vmatpush.xpose.msra.mxu0 %v514
        %753 = vmatpush.xpose.msra.mxu0 %v506
        %754 = vmatpush.xpose.msra.mxu0 %v498
        %755 = vmatpush.xpose.msra.mxu0 %v490
        %756 = vmatpush.xpose.msra.mxu0 %v482
        %757 = vmatpush.xpose.msra.mxu0 %v474
        %758 = vmatpush.xpose.msra.mxu0 %v466
        %759 = vmatpush.xpose.msra.mxu0 %v458
        %760 = vmatpush.xpose.msra.mxu0 %v450
        %761 = vmatpush.xpose.msra.mxu0 %v442
        %762 = vmatpush.xpose.msra.mxu0 %v434
        %763 = vmatmul.f32.gmra.mxu0 %v566
        %v764 = vpop.f32.mrf.mxu0
        %v765 = vadd.f32 %v584, %v764
        %766 = vdwg.mxu0
        %767 = vmatpush.xpose.msra.mxu0 %v555
        %768 = vmatpush.xpose.msra.mxu0 %v547
        %769 = vmatpush.xpose.msra.mxu0 %v539
        %770 = vmatpush.xpose.msra.mxu0 %v531
        %771 = vmatpush.xpose.msra.mxu0 %v523
        %772 = vmatpush.xpose.msra.mxu0 %v515
        %773 = vmatpush.xpose.msra.mxu0 %v507
        %774 = vmatpush.xpose.msra.mxu0 %v499
        %775 = vmatpush.xpose.msra.mxu0 %v491
        %776 = vmatpush.xpose.msra.mxu0 %v483
        %777 = vmatpush.xpose.msra.mxu0 %v475
        %778 = vmatpush.xpose.msra.mxu0 %v467
        %779 = vmatpush.xpose.msra.mxu0 %v459
        %780 = vmatpush.xpose.msra.mxu0 %v451
        %781 = vmatpush.xpose.msra.mxu0 %v443
        %782 = vmatpush.xpose.msra.mxu0 %v435
        %783 = vmatmul.f32.gmra.mxu0 %v567
        %v784 = vpop.f32.mrf.mxu0
        %v785 = vadd.f32 %v765, %v784
        %786 = vdwg.mxu0
        %787 = vmatpush.xpose.msra.mxu0 %v556
        %788 = vmatpush.xpose.msra.mxu0 %v548
        %789 = vmatpush.xpose.msra.mxu0 %v540
        %790 = vmatpush.xpose.msra.mxu0 %v532
        %791 = vmatpush.xpose.msra.mxu0 %v524
        %792 = vmatpush.xpose.msra.mxu0 %v516
        %793 = vmatpush.xpose.msra.mxu0 %v508
        %794 = vmatpush.xpose.msra.mxu0 %v500
        %795 = vmatpush.xpose.msra.mxu0 %v492
        %796 = vmatpush.xpose.msra.mxu0 %v484
        %797 = vmatpush.xpose.msra.mxu0 %v476
        %798 = vmatpush.xpose.msra.mxu0 %v468
        %799 = vmatpush.xpose.msra.mxu0 %v460
        %800 = vmatpush.xpose.msra.mxu0 %v452
        %801 = vmatpush.xpose.msra.mxu0 %v444
        %802 = vmatpush.xpose.msra.mxu0 %v436
        %803 = vmatmul.f32.gmra.mxu0 %v568
        %v804 = vpop.f32.mrf.mxu0
        %v805 = vadd.f32 %v785, %v804
        %806 = vdwg.mxu0
        %807 = vmatpush.xpose.msra.mxu0 %v557
        %808 = vmatpush.xpose.msra.mxu0 %v549
        %809 = vmatpush.xpose.msra.mxu0 %v541
        %810 = vmatpush.xpose.msra.mxu0 %v533
        %811 = vmatpush.xpose.msra.mxu0 %v525
        %812 = vmatpush.xpose.msra.mxu0 %v517
        %813 = vmatpush.xpose.msra.mxu0 %v509
        %814 = vmatpush.xpose.msra.mxu0 %v501
        %815 = vmatpush.xpose.msra.mxu0 %v493
        %816 = vmatpush.xpose.msra.mxu0 %v485
        %817 = vmatpush.xpose.msra.mxu0 %v477
        %818 = vmatpush.xpose.msra.mxu0 %v469
        %819 = vmatpush.xpose.msra.mxu0 %v461
        %820 = vmatpush.xpose.msra.mxu0 %v453
        %821 = vmatpush.xpose.msra.mxu0 %v445
        %822 = vmatpush.xpose.msra.mxu0 %v437
        %823 = vmatmul.f32.gmra.mxu0 %v569
        %v824 = vpop.f32.mrf.mxu0
        %v825 = vadd.f32 %v805, %v824
        %826 = vdwg.mxu0
        %827 = vmatpush.xpose.msra.mxu0 %v558
        %828 = vmatpush.xpose.msra.mxu0 %v550
        %829 = vmatpush.xpose.msra.mxu0 %v542
        %830 = vmatpush.xpose.msra.mxu0 %v534
        %831 = vmatpush.xpose.msra.mxu0 %v526
        %832 = vmatpush.xpose.msra.mxu0 %v518
        %833 = vmatpush.xpose.msra.mxu0 %v510
        %834 = vmatpush.xpose.msra.mxu0 %v502
        %835 = vmatpush.xpose.msra.mxu0 %v494
        %836 = vmatpush.xpose.msra.mxu0 %v486
        %837 = vmatpush.xpose.msra.mxu0 %v478
        %838 = vmatpush.xpose.msra.mxu0 %v470
        %839 = vmatpush.xpose.msra.mxu0 %v462
        %840 = vmatpush.xpose.msra.mxu0 %v454
        %841 = vmatpush.xpose.msra.mxu0 %v446
        %842 = vmatpush.xpose.msra.mxu0 %v438
        %843 = vmatmul.f32.gmra.mxu0 %v570
        %v844 = vpop.f32.mrf.mxu0
        %v845 = vadd.f32 %v825, %v844
        %846 = vdwg.mxu0
        %847 = vmatpush.xpose.msra.mxu0 %v559
        %848 = vmatpush.xpose.msra.mxu0 %v551
        %849 = vmatpush.xpose.msra.mxu0 %v543
        %850 = vmatpush.xpose.msra.mxu0 %v535
        %851 = vmatpush.xpose.msra.mxu0 %v527
        %852 = vmatpush.xpose.msra.mxu0 %v519
        %853 = vmatpush.xpose.msra.mxu0 %v511
        %854 = vmatpush.xpose.msra.mxu0 %v503
        %855 = vmatpush.xpose.msra.mxu0 %v495
        %856 = vmatpush.xpose.msra.mxu0 %v487
        %857 = vmatpush.xpose.msra.mxu0 %v479
        %858 = vmatpush.xpose.msra.mxu0 %v471
        %859 = vmatpush.xpose.msra.mxu0 %v463
        %860 = vmatpush.xpose.msra.mxu0 %v455
        %861 = vmatpush.xpose.msra.mxu0 %v447
        %862 = vmatpush.xpose.msra.mxu0 %v439
        %863 = vmatmul.f32.gmra.mxu0 %v571
        %v864 = vpop.f32.mrf.mxu0
        %v865 = vadd.f32 %v845, %v864
        %866 = vdwg.mxu0
        %867 = vmatpush.xpose.msra.mxu0 %v560
        %868 = vmatpush.xpose.msra.mxu0 %v552
        %869 = vmatpush.xpose.msra.mxu0 %v544
        %870 = vmatpush.xpose.msra.mxu0 %v536
        %871 = vmatpush.xpose.msra.mxu0 %v528
        %872 = vmatpush.xpose.msra.mxu0 %v520
        %873 = vmatpush.xpose.msra.mxu0 %v512
        %874 = vmatpush.xpose.msra.mxu0 %v504
        %875 = vmatpush.xpose.msra.mxu0 %v496
        %876 = vmatpush.xpose.msra.mxu0 %v488
        %877 = vmatpush.xpose.msra.mxu0 %v480
        %878 = vmatpush.xpose.msra.mxu0 %v472
        %879 = vmatpush.xpose.msra.mxu0 %v464
        %880 = vmatpush.xpose.msra.mxu0 %v456
        %881 = vmatpush.xpose.msra.mxu0 %v448
        %882 = vmatpush.xpose.msra.mxu0 %v440
        %883 = vmatmul.f32.gmra.mxu0 %v572
        %v884 = vpop.f32.mrf.mxu0
        %v885 = vadd.f32 %v865, %v884
        %886 = vdwg.mxu0
        %887 = vmatpush.xpose.msra.mxu0 %v561
        %888 = vmatpush.xpose.msra.mxu0 %v553
        %889 = vmatpush.xpose.msra.mxu0 %v545
        %890 = vmatpush.xpose.msra.mxu0 %v537
        %891 = vmatpush.xpose.msra.mxu0 %v529
        %892 = vmatpush.xpose.msra.mxu0 %v521
        %893 = vmatpush.xpose.msra.mxu0 %v513
        %894 = vmatpush.xpose.msra.mxu0 %v505
        %895 = vmatpush.xpose.msra.mxu0 %v497
        %896 = vmatpush.xpose.msra.mxu0 %v489
        %897 = vmatpush.xpose.msra.mxu0 %v481
        %898 = vmatpush.xpose.msra.mxu0 %v473
        %899 = vmatpush.xpose.msra.mxu0 %v465
        %900 = vmatpush.xpose.msra.mxu0 %v457
        %901 = vmatpush.xpose.msra.mxu0 %v449
        %902 = vmatpush.xpose.msra.mxu0 %v441
        %903 = vmatmul.f32.gmra.mxu0 %v573
        %v904 = vpop.f32.mrf.mxu0
        %v905 = vadd.f32 %v885, %v904
        %906 = vdwg.mxu0
        %v909 = vrot.slane %v905, 7
        %vm910 = vcmask 1040384
        %v911 = vsel %vm910, %v745, %v909
        %v913 = vrcp.pop %v911
        %v914 = vmul.f32 %v911, %v913
        %v915 = vsub.f32 1.0, %v914
        %v916 = vmul.f32 %v913, %v915
        %v917 = vadd.f32 %v913, %v916
        %vm918 = vweird.f32 %v911
        %vm919 = vweird.f32 %v913
        %vm920 = vmor %vm918, %vm919
        %v921 = vsel %vm920, %v913, %v917
        %v922 = vand.u32 2147483647, %v911
        %vm923 = vcmp.eq.f32.partialorder %v922, 8.507059e+37
        %v924 = vand.u32 %v911, 2147483648
        %v925 = vor.u32 1.1754944e-38, %v924
        %v926 = vsel %vm923, %v925, %v921
        %v927 = vmul.f32 %v563, %v926
        %v928 = vld [vmem:[#allocation2] sm:$0xff]
        %v930 = vperm.slane %v927, 0
        %v931 = vperm.slane %v927, 1
        %934 = vmatpush.msra.mxu0 %v426
        %935 = vmatpush.msra.mxu0 %v418
        %936 = vmatpush.msra.mxu0 %v410
        %937 = vmatpush.msra.mxu0 %v402
        %938 = vmatpush.msra.mxu0 %v394
        %939 = vmatpush.msra.mxu0 %v386
        %940 = vmatpush.msra.mxu0 %v378
        %941 = vmatpush.msra.mxu0 %v370
        %942 = vmatpush.msra.mxu0 %v362
        %943 = vmatpush.msra.mxu0 %v354
        %944 = vmatpush.msra.mxu0 %v346
        %945 = vmatpush.msra.mxu0 %v338
        %946 = vmatpush.msra.mxu0 %v330
        %947 = vmatpush.msra.mxu0 %v322
        %948 = vmatpush.msra.mxu0 %v314
        %949 = vmatpush.msra.mxu0 %v306
        %950 = vmatmul.f32.gmra.mxu0 %v930
        %v951 = vpop.f32.mrf.mxu0
        %v952 = vadd.f32 0.0, %v951
        %953 = vdwg.mxu0
        %954 = vmatpush.msra.mxu0 %v554
        %955 = vmatpush.msra.mxu0 %v546
        %956 = vmatpush.msra.mxu0 %v538
        %957 = vmatpush.msra.mxu0 %v530
        %958 = vmatpush.msra.mxu0 %v522
        %959 = vmatpush.msra.mxu0 %v514
        %960 = vmatpush.msra.mxu0 %v506
        %961 = vmatpush.msra.mxu0 %v498
        %962 = vmatpush.msra.mxu0 %v490
        %963 = vmatpush.msra.mxu0 %v482
        %964 = vmatpush.msra.mxu0 %v474
        %965 = vmatpush.msra.mxu0 %v466
        %966 = vmatpush.msra.mxu0 %v458
        %967 = vmatpush.msra.mxu0 %v450
        %968 = vmatpush.msra.mxu0 %v442
        %969 = vmatpush.msra.mxu0 %v434
        %970 = vmatmul.f32.gmra.mxu0 %v931
        %v971 = vpop.f32.mrf.mxu0
        %v972 = vadd.f32 %v952, %v971
        %973 = vdwg.mxu0
        %974 = vmatpush.msra.mxu0 %v427
        %975 = vmatpush.msra.mxu0 %v419
        %976 = vmatpush.msra.mxu0 %v411
        %977 = vmatpush.msra.mxu0 %v403
        %978 = vmatpush.msra.mxu0 %v395
        %979 = vmatpush.msra.mxu0 %v387
        %980 = vmatpush.msra.mxu0 %v379
        %981 = vmatpush.msra.mxu0 %v371
        %982 = vmatpush.msra.mxu0 %v363
        %983 = vmatpush.msra.mxu0 %v355
        %984 = vmatpush.msra.mxu0 %v347
        %985 = vmatpush.msra.mxu0 %v339
        %986 = vmatpush.msra.mxu0 %v331
        %987 = vmatpush.msra.mxu0 %v323
        %988 = vmatpush.msra.mxu0 %v315
        %989 = vmatpush.msra.mxu0 %v307
        %990 = vmatmul.f32.gmra.mxu0 %v930
        %v991 = vpop.f32.mrf.mxu0
        %v992 = vadd.f32 0.0, %v991
        %993 = vdwg.mxu0
        %994 = vmatpush.msra.mxu0 %v555
        %995 = vmatpush.msra.mxu0 %v547
        %996 = vmatpush.msra.mxu0 %v539
        %997 = vmatpush.msra.mxu0 %v531
        %998 = vmatpush.msra.mxu0 %v523
        %999 = vmatpush.msra.mxu0 %v515
        %1000 = vmatpush.msra.mxu0 %v507
        %1001 = vmatpush.msra.mxu0 %v499
        %1002 = vmatpush.msra.mxu0 %v491
        %1003 = vmatpush.msra.mxu0 %v483
        %1004 = vmatpush.msra.mxu0 %v475
        %1005 = vmatpush.msra.mxu0 %v467
        %1006 = vmatpush.msra.mxu0 %v459
        %1007 = vmatpush.msra.mxu0 %v451
        %1008 = vmatpush.msra.mxu0 %v443
        %1009 = vmatpush.msra.mxu0 %v435
        %1010 = vmatmul.f32.gmra.mxu0 %v931
        %v1011 = vpop.f32.mrf.mxu0
        %v1012 = vadd.f32 %v992, %v1011
        %1013 = vdwg.mxu0
        %1014 = vmatpush.msra.mxu0 %v428
        %1015 = vmatpush.msra.mxu0 %v420
        %1016 = vmatpush.msra.mxu0 %v412
        %1017 = vmatpush.msra.mxu0 %v404
        %1018 = vmatpush.msra.mxu0 %v396
        %1019 = vmatpush.msra.mxu0 %v388
        %1020 = vmatpush.msra.mxu0 %v380
        %1021 = vmatpush.msra.mxu0 %v372
        %1022 = vmatpush.msra.mxu0 %v364
        %1023 = vmatpush.msra.mxu0 %v356
        %1024 = vmatpush.msra.mxu0 %v348
        %1025 = vmatpush.msra.mxu0 %v340
        %1026 = vmatpush.msra.mxu0 %v332
        %1027 = vmatpush.msra.mxu0 %v324
        %1028 = vmatpush.msra.mxu0 %v316
        %1029 = vmatpush.msra.mxu0 %v308
        %1030 = vmatmul.f32.gmra.mxu0 %v930
        %v1031 = vpop.f32.mrf.mxu0
        %v1032 = vadd.f32 0.0, %v1031
        %1033 = vdwg.mxu0
        %1034 = vmatpush.msra.mxu0 %v556
        %1035 = vmatpush.msra.mxu0 %v548
        %1036 = vmatpush.msra.mxu0 %v540
        %1037 = vmatpush.msra.mxu0 %v532
        %1038 = vmatpush.msra.mxu0 %v524
        %1039 = vmatpush.msra.mxu0 %v516
        %1040 = vmatpush.msra.mxu0 %v508
        %1041 = vmatpush.msra.mxu0 %v500
        %1042 = vmatpush.msra.mxu0 %v492
        %1043 = vmatpush.msra.mxu0 %v484
        %1044 = vmatpush.msra.mxu0 %v476
        %1045 = vmatpush.msra.mxu0 %v468
        %1046 = vmatpush.msra.mxu0 %v460
        %1047 = vmatpush.msra.mxu0 %v452
        %1048 = vmatpush.msra.mxu0 %v444
        %1049 = vmatpush.msra.mxu0 %v436
        %1050 = vmatmul.f32.gmra.mxu0 %v931
        %v1051 = vpop.f32.mrf.mxu0
        %v1052 = vadd.f32 %v1032, %v1051
        %1053 = vdwg.mxu0
        %1054 = vmatpush.msra.mxu0 %v429
        %1055 = vmatpush.msra.mxu0 %v421
        %1056 = vmatpush.msra.mxu0 %v413
        %1057 = vmatpush.msra.mxu0 %v405
        %1058 = vmatpush.msra.mxu0 %v397
        %1059 = vmatpush.msra.mxu0 %v389
        %1060 = vmatpush.msra.mxu0 %v381
        %1061 = vmatpush.msra.mxu0 %v373
        %1062 = vmatpush.msra.mxu0 %v365
        %1063 = vmatpush.msra.mxu0 %v357
        %1064 = vmatpush.msra.mxu0 %v349
        %1065 = vmatpush.msra.mxu0 %v341
        %1066 = vmatpush.msra.mxu0 %v333
        %1067 = vmatpush.msra.mxu0 %v325
        %1068 = vmatpush.msra.mxu0 %v317
        %1069 = vmatpush.msra.mxu0 %v309
        %1070 = vmatmul.f32.gmra.mxu0 %v930
        %v1071 = vpop.f32.mrf.mxu0
        %v1072 = vadd.f32 0.0, %v1071
        %1073 = vdwg.mxu0
        %1074 = vmatpush.msra.mxu0 %v557
        %1075 = vmatpush.msra.mxu0 %v549
        %1076 = vmatpush.msra.mxu0 %v541
        %1077 = vmatpush.msra.mxu0 %v533
        %1078 = vmatpush.msra.mxu0 %v525
        %1079 = vmatpush.msra.mxu0 %v517
        %1080 = vmatpush.msra.mxu0 %v509
        %1081 = vmatpush.msra.mxu0 %v501
        %1082 = vmatpush.msra.mxu0 %v493
        %1083 = vmatpush.msra.mxu0 %v485
        %1084 = vmatpush.msra.mxu0 %v477
        %1085 = vmatpush.msra.mxu0 %v469
        %1086 = vmatpush.msra.mxu0 %v461
        %1087 = vmatpush.msra.mxu0 %v453
        %1088 = vmatpush.msra.mxu0 %v445
        %1089 = vmatpush.msra.mxu0 %v437
        %1090 = vmatmul.f32.gmra.mxu0 %v931
        %v1091 = vpop.f32.mrf.mxu0
        %v1092 = vadd.f32 %v1072, %v1091
        %1093 = vdwg.mxu0
        %1094 = vmatpush.msra.mxu0 %v430
        %1095 = vmatpush.msra.mxu0 %v422
        %1096 = vmatpush.msra.mxu0 %v414
        %1097 = vmatpush.msra.mxu0 %v406
        %1098 = vmatpush.msra.mxu0 %v398
        %1099 = vmatpush.msra.mxu0 %v390
        %1100 = vmatpush.msra.mxu0 %v382
        %1101 = vmatpush.msra.mxu0 %v374
        %1102 = vmatpush.msra.mxu0 %v366
        %1103 = vmatpush.msra.mxu0 %v358
        %1104 = vmatpush.msra.mxu0 %v350
        %1105 = vmatpush.msra.mxu0 %v342
        %1106 = vmatpush.msra.mxu0 %v334
        %1107 = vmatpush.msra.mxu0 %v326
        %1108 = vmatpush.msra.mxu0 %v318
        %1109 = vmatpush.msra.mxu0 %v310
        %1110 = vmatmul.f32.gmra.mxu0 %v930
        %v1111 = vpop.f32.mrf.mxu0
        %v1112 = vadd.f32 0.0, %v1111
        %1113 = vdwg.mxu0
        %1114 = vmatpush.msra.mxu0 %v558
        %1115 = vmatpush.msra.mxu0 %v550
        %1116 = vmatpush.msra.mxu0 %v542
        %1117 = vmatpush.msra.mxu0 %v534
        %1118 = vmatpush.msra.mxu0 %v526
        %1119 = vmatpush.msra.mxu0 %v518
        %1120 = vmatpush.msra.mxu0 %v510
        %1121 = vmatpush.msra.mxu0 %v502
        %1122 = vmatpush.msra.mxu0 %v494
        %1123 = vmatpush.msra.mxu0 %v486
        %1124 = vmatpush.msra.mxu0 %v478
        %1125 = vmatpush.msra.mxu0 %v470
        %1126 = vmatpush.msra.mxu0 %v462
        %1127 = vmatpush.msra.mxu0 %v454
        %1128 = vmatpush.msra.mxu0 %v446
        %1129 = vmatpush.msra.mxu0 %v438
        %1130 = vmatmul.f32.gmra.mxu0 %v931
        %v1131 = vpop.f32.mrf.mxu0
        %v1132 = vadd.f32 %v1112, %v1131
        %1133 = vdwg.mxu0
        %1134 = vmatpush.msra.mxu0 %v431
        %1135 = vmatpush.msra.mxu0 %v423
        %1136 = vmatpush.msra.mxu0 %v415
        %1137 = vmatpush.msra.mxu0 %v407
        %1138 = vmatpush.msra.mxu0 %v399
        %1139 = vmatpush.msra.mxu0 %v391
        %1140 = vmatpush.msra.mxu0 %v383
        %1141 = vmatpush.msra.mxu0 %v375
        %1142 = vmatpush.msra.mxu0 %v367
        %1143 = vmatpush.msra.mxu0 %v359
        %1144 = vmatpush.msra.mxu0 %v351
        %1145 = vmatpush.msra.mxu0 %v343
        %1146 = vmatpush.msra.mxu0 %v335
        %1147 = vmatpush.msra.mxu0 %v327
        %1148 = vmatpush.msra.mxu0 %v319
        %1149 = vmatpush.msra.mxu0 %v311
        %1150 = vmatmul.f32.gmra.mxu0 %v930
        %v1151 = vpop.f32.mrf.mxu0
        %v1152 = vadd.f32 0.0, %v1151
        %1153 = vdwg.mxu0
        %1154 = vmatpush.msra.mxu0 %v559
        %1155 = vmatpush.msra.mxu0 %v551
        %1156 = vmatpush.msra.mxu0 %v543
        %1157 = vmatpush.msra.mxu0 %v535
        %1158 = vmatpush.msra.mxu0 %v527
        %1159 = vmatpush.msra.mxu0 %v519
        %1160 = vmatpush.msra.mxu0 %v511
        %1161 = vmatpush.msra.mxu0 %v503
        %1162 = vmatpush.msra.mxu0 %v495
        %1163 = vmatpush.msra.mxu0 %v487
        %1164 = vmatpush.msra.mxu0 %v479
        %1165 = vmatpush.msra.mxu0 %v471
        %1166 = vmatpush.msra.mxu0 %v463
        %1167 = vmatpush.msra.mxu0 %v455
        %1168 = vmatpush.msra.mxu0 %v447
        %1169 = vmatpush.msra.mxu0 %v439
        %1170 = vmatmul.f32.gmra.mxu0 %v931
        %v1171 = vpop.f32.mrf.mxu0
        %v1172 = vadd.f32 %v1152, %v1171
        %1173 = vdwg.mxu0
        %1174 = vmatpush.msra.mxu0 %v432
        %1175 = vmatpush.msra.mxu0 %v424
        %1176 = vmatpush.msra.mxu0 %v416
        %1177 = vmatpush.msra.mxu0 %v408
        %1178 = vmatpush.msra.mxu0 %v400
        %1179 = vmatpush.msra.mxu0 %v392
        %1180 = vmatpush.msra.mxu0 %v384
        %1181 = vmatpush.msra.mxu0 %v376
        %1182 = vmatpush.msra.mxu0 %v368
        %1183 = vmatpush.msra.mxu0 %v360
        %1184 = vmatpush.msra.mxu0 %v352
        %1185 = vmatpush.msra.mxu0 %v344
        %1186 = vmatpush.msra.mxu0 %v336
        %1187 = vmatpush.msra.mxu0 %v328
        %1188 = vmatpush.msra.mxu0 %v320
        %1189 = vmatpush.msra.mxu0 %v312
        %1190 = vmatmul.f32.gmra.mxu0 %v930
        %v1191 = vpop.f32.mrf.mxu0
        %v1192 = vadd.f32 0.0, %v1191
        %1193 = vdwg.mxu0
        %1194 = vmatpush.msra.mxu0 %v560
        %1195 = vmatpush.msra.mxu0 %v552
        %1196 = vmatpush.msra.mxu0 %v544
        %1197 = vmatpush.msra.mxu0 %v536
        %1198 = vmatpush.msra.mxu0 %v528
        %1199 = vmatpush.msra.mxu0 %v520
        %1200 = vmatpush.msra.mxu0 %v512
        %1201 = vmatpush.msra.mxu0 %v504
        %1202 = vmatpush.msra.mxu0 %v496
        %1203 = vmatpush.msra.mxu0 %v488
        %1204 = vmatpush.msra.mxu0 %v480
        %1205 = vmatpush.msra.mxu0 %v472
        %1206 = vmatpush.msra.mxu0 %v464
        %1207 = vmatpush.msra.mxu0 %v456
        %1208 = vmatpush.msra.mxu0 %v448
        %1209 = vmatpush.msra.mxu0 %v440
        %1210 = vmatmul.f32.gmra.mxu0 %v931
        %v1211 = vpop.f32.mrf.mxu0
        %v1212 = vadd.f32 %v1192, %v1211
        %1213 = vdwg.mxu0
        %1214 = vmatpush.msra.mxu0 %v433
        %1215 = vmatpush.msra.mxu0 %v425
        %1216 = vmatpush.msra.mxu0 %v417
        %1217 = vmatpush.msra.mxu0 %v409
        %1218 = vmatpush.msra.mxu0 %v401
        %1219 = vmatpush.msra.mxu0 %v393
        %1220 = vmatpush.msra.mxu0 %v385
        %1221 = vmatpush.msra.mxu0 %v377
        %1222 = vmatpush.msra.mxu0 %v369
        %1223 = vmatpush.msra.mxu0 %v361
        %1224 = vmatpush.msra.mxu0 %v353
        %1225 = vmatpush.msra.mxu0 %v345
        %1226 = vmatpush.msra.mxu0 %v337
        %1227 = vmatpush.msra.mxu0 %v329
        %1228 = vmatpush.msra.mxu0 %v321
        %1229 = vmatpush.msra.mxu0 %v313
        %1230 = vmatmul.f32.gmra.mxu0 %v930
        %v1231 = vpop.f32.mrf.mxu0
        %v1232 = vadd.f32 0.0, %v1231
        %1233 = vdwg.mxu0
        %1234 = vmatpush.msra.mxu0 %v561
        %1235 = vmatpush.msra.mxu0 %v553
        %1236 = vmatpush.msra.mxu0 %v545
        %1237 = vmatpush.msra.mxu0 %v537
        %1238 = vmatpush.msra.mxu0 %v529
        %1239 = vmatpush.msra.mxu0 %v521
        %1240 = vmatpush.msra.mxu0 %v513
        %1241 = vmatpush.msra.mxu0 %v505
        %1242 = vmatpush.msra.mxu0 %v497
        %1243 = vmatpush.msra.mxu0 %v489
        %1244 = vmatpush.msra.mxu0 %v481
        %1245 = vmatpush.msra.mxu0 %v473
        %1246 = vmatpush.msra.mxu0 %v465
        %1247 = vmatpush.msra.mxu0 %v457
        %1248 = vmatpush.msra.mxu0 %v449
        %1249 = vmatpush.msra.mxu0 %v441
        %1250 = vmatmul.f32.gmra.mxu0 %v931
        %v1251 = vpop.f32.mrf.mxu0
        %v1252 = vadd.f32 %v1232, %v1251
        %1253 = vdwg.mxu0
        %v1262 = vrot.slane %v1012, 7
        %v1263 = vrot.slane %v1052, 6
        %v1264 = vrot.slane %v1092, 5
        %v1265 = vrot.slane %v1132, 4
        %v1266 = vrot.slane %v1172, 3
        %v1267 = vrot.slane %v1212, 2
        %v1268 = vrot.slane %v1252, 1
        %v1269 = vsel %vm910, %v972, %v1262
        %vm1270 = vcmask 1042434
        %v1271 = vsel %vm1270, %v1263, %v1264
        %vm1272 = vcmask 1041408
        %v1273 = vsel %vm1272, %v1269, %v1271
        %vm1274 = vcmask 1044484
        %v1275 = vsel %vm1274, %v1265, %v1266
        %vm1276 = vcmask 1046534
        %v1277 = vsel %vm1276, %v1267, %v1268
        %vm1278 = vcmask 1045508
        %v1279 = vsel %vm1278, %v1275, %v1277
        %vm1280 = vcmask 1043456
        %v1281 = vsel %vm1280, %v1273, %v1279
        %v1283 = vadd.f32 %v928, %v1281
        %1284 = vst [vmem:[#allocation2] sm:$0xff] %v1283
        %v1285 = vld [vmem:[#allocation3] sm:$0xff]
        %v1286 = vadd.f32 %v306, %v314
        %v1287 = vadd.f32 %v1286, %v322
        %v1288 = vadd.f32 %v1287, %v330
        %v1289 = vadd.f32 %v1288, %v338
        %v1290 = vadd.f32 %v1289, %v346
        %v1291 = vadd.f32 %v1290, %v354
        %v1292 = vadd.f32 %v1291, %v362
        %v1293 = vadd.f32 %v1292, %v370
        %v1294 = vadd.f32 %v1293, %v378
        %v1295 = vadd.f32 %v1294, %v386
        %v1296 = vadd.f32 %v1295, %v394
        %v1297 = vadd.f32 %v1296, %v402
        %v1298 = vadd.f32 %v1297, %v410
        %v1299 = vadd.f32 %v1298, %v418
        %v1300 = vadd.f32 %v1299, %v426
        %v1301 = vadd.f32 %v1300, %v434
        %v1302 = vadd.f32 %v1301, %v442
        %v1303 = vadd.f32 %v1302, %v450
        %v1304 = vadd.f32 %v1303, %v458
        %v1305 = vadd.f32 %v1304, %v466
        %v1306 = vadd.f32 %v1305, %v474
        %v1307 = vadd.f32 %v1306, %v482
        %v1308 = vadd.f32 %v1307, %v490
        %v1309 = vadd.f32 %v1308, %v498
        %v1310 = vadd.f32 %v1309, %v506
        %v1311 = vadd.f32 %v1310, %v514
        %v1312 = vadd.f32 %v1311, %v522
        %v1313 = vadd.f32 %v1312, %v530
        %v1314 = vadd.f32 %v1313, %v538
        %v1315 = vadd.f32 %v1314, %v546
        %v1316 = vadd.f32 %v1315, %v554
        %v1317 = vrot.slane %v1316, 4
        %v1318 = vadd.f32 %v1316, %v1317
        %v1319 = vrot.slane %v1318, 2
        %v1320 = vadd.f32 %v1318, %v1319
        %v1321 = vrot.slane %v1320, 1
        %v1322 = vadd.f32 %v1320, %v1321
        %v1323 = vadd.f32 %v307, %v315
        %v1324 = vadd.f32 %v1323, %v323
        %v1325 = vadd.f32 %v1324, %v331
        %v1326 = vadd.f32 %v1325, %v339
        %v1327 = vadd.f32 %v1326, %v347
        %v1328 = vadd.f32 %v1327, %v355
        %v1329 = vadd.f32 %v1328, %v363
        %v1330 = vadd.f32 %v1329, %v371
        %v1331 = vadd.f32 %v1330, %v379
        %v1332 = vadd.f32 %v1331, %v387
        %v1333 = vadd.f32 %v1332, %v395
        %v1334 = vadd.f32 %v1333, %v403
        %v1335 = vadd.f32 %v1334, %v411
        %v1336 = vadd.f32 %v1335, %v419
        %v1337 = vadd.f32 %v1336, %v427
        %v1338 = vadd.f32 %v1337, %v435
        %v1339 = vadd.f32 %v1338, %v443
        %v1340 = vadd.f32 %v1339, %v451
        %v1341 = vadd.f32 %v1340, %v459
        %v1342 = vadd.f32 %v1341, %v467
        %v1343 = vadd.f32 %v1342, %v475
        %v1344 = vadd.f32 %v1343, %v483
        %v1345 = vadd.f32 %v1344, %v491
        %v1346 = vadd.f32 %v1345, %v499
        %v1347 = vadd.f32 %v1346, %v507
        %v1348 = vadd.f32 %v1347, %v515
        %v1349 = vadd.f32 %v1348, %v523
        %v1350 = vadd.f32 %v1349, %v531
        %v1351 = vadd.f32 %v1350, %v539
        %v1352 = vadd.f32 %v1351, %v547
        %v1353 = vadd.f32 %v1352, %v555
        %v1354 = vrot.slane %v1353, 4
        %v1355 = vadd.f32 %v1353, %v1354
        %v1356 = vrot.slane %v1355, 2
        %v1357 = vadd.f32 %v1355, %v1356
        %v1358 = vrot.slane %v1357, 1
        %v1359 = vadd.f32 %v1357, %v1358
        %v1360 = vadd.f32 %v308, %v316
        %v1361 = vadd.f32 %v1360, %v324
        %v1362 = vadd.f32 %v1361, %v332
        %v1363 = vadd.f32 %v1362, %v340
        %v1364 = vadd.f32 %v1363, %v348
        %v1365 = vadd.f32 %v1364, %v356
        %v1366 = vadd.f32 %v1365, %v364
        %v1367 = vadd.f32 %v1366, %v372
        %v1368 = vadd.f32 %v1367, %v380
        %v1369 = vadd.f32 %v1368, %v388
        %v1370 = vadd.f32 %v1369, %v396
        %v1371 = vadd.f32 %v1370, %v404
        %v1372 = vadd.f32 %v1371, %v412
        %v1373 = vadd.f32 %v1372, %v420
        %v1374 = vadd.f32 %v1373, %v428
        %v1375 = vadd.f32 %v1374, %v436
        %v1376 = vadd.f32 %v1375, %v444
        %v1377 = vadd.f32 %v1376, %v452
        %v1378 = vadd.f32 %v1377, %v460
        %v1379 = vadd.f32 %v1378, %v468
        %v1380 = vadd.f32 %v1379, %v476
        %v1381 = vadd.f32 %v1380, %v484
        %v1382 = vadd.f32 %v1381, %v492
        %v1383 = vadd.f32 %v1382, %v500
        %v1384 = vadd.f32 %v1383, %v508
        %v1385 = vadd.f32 %v1384, %v516
        %v1386 = vadd.f32 %v1385, %v524
        %v1387 = vadd.f32 %v1386, %v532
        %v1388 = vadd.f32 %v1387, %v540
        %v1389 = vadd.f32 %v1388, %v548
        %v1390 = vadd.f32 %v1389, %v556
        %v1391 = vrot.slane %v1390, 4
        %v1392 = vadd.f32 %v1390, %v1391
        %v1393 = vrot.slane %v1392, 2
        %v1394 = vadd.f32 %v1392, %v1393
        %v1395 = vrot.slane %v1394, 1
        %v1396 = vadd.f32 %v1394, %v1395
        %v1397 = vadd.f32 %v309, %v317
        %v1398 = vadd.f32 %v1397, %v325
        %v1399 = vadd.f32 %v1398, %v333
        %v1400 = vadd.f32 %v1399, %v341
        %v1401 = vadd.f32 %v1400, %v349
        %v1402 = vadd.f32 %v1401, %v357
        %v1403 = vadd.f32 %v1402, %v365
        %v1404 = vadd.f32 %v1403, %v373
        %v1405 = vadd.f32 %v1404, %v381
        %v1406 = vadd.f32 %v1405, %v389
        %v1407 = vadd.f32 %v1406, %v397
        %v1408 = vadd.f32 %v1407, %v405
        %v1409 = vadd.f32 %v1408, %v413
        %v1410 = vadd.f32 %v1409, %v421
        %v1411 = vadd.f32 %v1410, %v429
        %v1412 = vadd.f32 %v1411, %v437
        %v1413 = vadd.f32 %v1412, %v445
        %v1414 = vadd.f32 %v1413, %v453
        %v1415 = vadd.f32 %v1414, %v461
        %v1416 = vadd.f32 %v1415, %v469
        %v1417 = vadd.f32 %v1416, %v477
        %v1418 = vadd.f32 %v1417, %v485
        %v1419 = vadd.f32 %v1418, %v493
        %v1420 = vadd.f32 %v1419, %v501
        %v1421 = vadd.f32 %v1420, %v509
        %v1422 = vadd.f32 %v1421, %v517
        %v1423 = vadd.f32 %v1422, %v525
        %v1424 = vadd.f32 %v1423, %v533
        %v1425 = vadd.f32 %v1424, %v541
        %v1426 = vadd.f32 %v1425, %v549
        %v1427 = vadd.f32 %v1426, %v557
        %v1428 = vrot.slane %v1427, 4
        %v1429 = vadd.f32 %v1427, %v1428
        %v1430 = vrot.slane %v1429, 2
        %v1431 = vadd.f32 %v1429, %v1430
        %v1432 = vrot.slane %v1431, 1
        %v1433 = vadd.f32 %v1431, %v1432
        %v1434 = vadd.f32 %v310, %v318
        %v1435 = vadd.f32 %v1434, %v326
        %v1436 = vadd.f32 %v1435, %v334
        %v1437 = vadd.f32 %v1436, %v342
        %v1438 = vadd.f32 %v1437, %v350
        %v1439 = vadd.f32 %v1438, %v358
        %v1440 = vadd.f32 %v1439, %v366
        %v1441 = vadd.f32 %v1440, %v374
        %v1442 = vadd.f32 %v1441, %v382
        %v1443 = vadd.f32 %v1442, %v390
        %v1444 = vadd.f32 %v1443, %v398
        %v1445 = vadd.f32 %v1444, %v406
        %v1446 = vadd.f32 %v1445, %v414
        %v1447 = vadd.f32 %v1446, %v422
        %v1448 = vadd.f32 %v1447, %v430
        %v1449 = vadd.f32 %v1448, %v438
        %v1450 = vadd.f32 %v1449, %v446
        %v1451 = vadd.f32 %v1450, %v454
        %v1452 = vadd.f32 %v1451, %v462
        %v1453 = vadd.f32 %v1452, %v470
        %v1454 = vadd.f32 %v1453, %v478
        %v1455 = vadd.f32 %v1454, %v486
        %v1456 = vadd.f32 %v1455, %v494
        %v1457 = vadd.f32 %v1456, %v502
        %v1458 = vadd.f32 %v1457, %v510
        %v1459 = vadd.f32 %v1458, %v518
        %v1460 = vadd.f32 %v1459, %v526
        %v1461 = vadd.f32 %v1460, %v534
        %v1462 = vadd.f32 %v1461, %v542
        %v1463 = vadd.f32 %v1462, %v550
        %v1464 = vadd.f32 %v1463, %v558
        %v1465 = vrot.slane %v1464, 4
        %v1466 = vadd.f32 %v1464, %v1465
        %v1467 = vrot.slane %v1466, 2
        %v1468 = vadd.f32 %v1466, %v1467
        %v1469 = vrot.slane %v1468, 1
        %v1470 = vadd.f32 %v1468, %v1469
        %v1471 = vadd.f32 %v311, %v319
        %v1472 = vadd.f32 %v1471, %v327
        %v1473 = vadd.f32 %v1472, %v335
        %v1474 = vadd.f32 %v1473, %v343
        %v1475 = vadd.f32 %v1474, %v351
        %v1476 = vadd.f32 %v1475, %v359
        %v1477 = vadd.f32 %v1476, %v367
        %v1478 = vadd.f32 %v1477, %v375
        %v1479 = vadd.f32 %v1478, %v383
        %v1480 = vadd.f32 %v1479, %v391
        %v1481 = vadd.f32 %v1480, %v399
        %v1482 = vadd.f32 %v1481, %v407
        %v1483 = vadd.f32 %v1482, %v415
        %v1484 = vadd.f32 %v1483, %v423
        %v1485 = vadd.f32 %v1484, %v431
        %v1486 = vadd.f32 %v1485, %v439
        %v1487 = vadd.f32 %v1486, %v447
        %v1488 = vadd.f32 %v1487, %v455
        %v1489 = vadd.f32 %v1488, %v463
        %v1490 = vadd.f32 %v1489, %v471
        %v1491 = vadd.f32 %v1490, %v479
        %v1492 = vadd.f32 %v1491, %v487
        %v1493 = vadd.f32 %v1492, %v495
        %v1494 = vadd.f32 %v1493, %v503
        %v1495 = vadd.f32 %v1494, %v511
        %v1496 = vadd.f32 %v1495, %v519
        %v1497 = vadd.f32 %v1496, %v527
        %v1498 = vadd.f32 %v1497, %v535
        %v1499 = vadd.f32 %v1498, %v543
        %v1500 = vadd.f32 %v1499, %v551
        %v1501 = vadd.f32 %v1500, %v559
        %v1502 = vrot.slane %v1501, 4
        %v1503 = vadd.f32 %v1501, %v1502
        %v1504 = vrot.slane %v1503, 2
        %v1505 = vadd.f32 %v1503, %v1504
        %v1506 = vrot.slane %v1505, 1
        %v1507 = vadd.f32 %v1505, %v1506
        %v1508 = vadd.f32 %v312, %v320
        %v1509 = vadd.f32 %v1508, %v328
        %v1510 = vadd.f32 %v1509, %v336
        %v1511 = vadd.f32 %v1510, %v344
        %v1512 = vadd.f32 %v1511, %v352
        %v1513 = vadd.f32 %v1512, %v360
        %v1514 = vadd.f32 %v1513, %v368
        %v1515 = vadd.f32 %v1514, %v376
        %v1516 = vadd.f32 %v1515, %v384
        %v1517 = vadd.f32 %v1516, %v392
        %v1518 = vadd.f32 %v1517, %v400
        %v1519 = vadd.f32 %v1518, %v408
        %v1520 = vadd.f32 %v1519, %v416
        %v1521 = vadd.f32 %v1520, %v424
        %v1522 = vadd.f32 %v1521, %v432
        %v1523 = vadd.f32 %v1522, %v440
        %v1524 = vadd.f32 %v1523, %v448
        %v1525 = vadd.f32 %v1524, %v456
        %v1526 = vadd.f32 %v1525, %v464
        %v1527 = vadd.f32 %v1526, %v472
        %v1528 = vadd.f32 %v1527, %v480
        %v1529 = vadd.f32 %v1528, %v488
        %v1530 = vadd.f32 %v1529, %v496
        %v1531 = vadd.f32 %v1530, %v504
        %v1532 = vadd.f32 %v1531, %v512
        %v1533 = vadd.f32 %v1532, %v520
        %v1534 = vadd.f32 %v1533, %v528
        %v1535 = vadd.f32 %v1534, %v536
        %v1536 = vadd.f32 %v1535, %v544
        %v1537 = vadd.f32 %v1536, %v552
        %v1538 = vadd.f32 %v1537, %v560
        %v1539 = vrot.slane %v1538, 4
        %v1540 = vadd.f32 %v1538, %v1539
        %v1541 = vrot.slane %v1540, 2
        %v1542 = vadd.f32 %v1540, %v1541
        %v1543 = vrot.slane %v1542, 1
        %v1544 = vadd.f32 %v1542, %v1543
        %v1545 = vadd.f32 %v313, %v321
        %v1546 = vadd.f32 %v1545, %v329
        %v1547 = vadd.f32 %v1546, %v337
        %v1548 = vadd.f32 %v1547, %v345
        %v1549 = vadd.f32 %v1548, %v353
        %v1550 = vadd.f32 %v1549, %v361
        %v1551 = vadd.f32 %v1550, %v369
        %v1552 = vadd.f32 %v1551, %v377
        %v1553 = vadd.f32 %v1552, %v385
        %v1554 = vadd.f32 %v1553, %v393
        %v1555 = vadd.f32 %v1554, %v401
        %v1556 = vadd.f32 %v1555, %v409
        %v1557 = vadd.f32 %v1556, %v417
        %v1558 = vadd.f32 %v1557, %v425
        %v1559 = vadd.f32 %v1558, %v433
        %v1560 = vadd.f32 %v1559, %v441
        %v1561 = vadd.f32 %v1560, %v449
        %v1562 = vadd.f32 %v1561, %v457
        %v1563 = vadd.f32 %v1562, %v465
        %v1564 = vadd.f32 %v1563, %v473
        %v1565 = vadd.f32 %v1564, %v481
        %v1566 = vadd.f32 %v1565, %v489
        %v1567 = vadd.f32 %v1566, %v497
        %v1568 = vadd.f32 %v1567, %v505
        %v1569 = vadd.f32 %v1568, %v513
        %v1570 = vadd.f32 %v1569, %v521
        %v1571 = vadd.f32 %v1570, %v529
        %v1572 = vadd.f32 %v1571, %v537
        %v1573 = vadd.f32 %v1572, %v545
        %v1574 = vadd.f32 %v1573, %v553
        %v1575 = vadd.f32 %v1574, %v561
        %v1576 = vrot.slane %v1575, 4
        %v1577 = vadd.f32 %v1575, %v1576
        %v1578 = vrot.slane %v1577, 2
        %v1579 = vadd.f32 %v1577, %v1578
        %v1580 = vrot.slane %v1579, 1
        %v1581 = vadd.f32 %v1579, %v1580
        %v1590 = vrot.slane %v1359, 7
        %v1591 = vrot.slane %v1396, 6
        %v1592 = vrot.slane %v1433, 5
        %v1593 = vrot.slane %v1470, 4
        %v1594 = vrot.slane %v1507, 3
        %v1595 = vrot.slane %v1544, 2
        %v1596 = vrot.slane %v1581, 1
        %v1597 = vsel %vm910, %v1322, %v1590
        %v1598 = vsel %vm1270, %v1591, %v1592
        %v1599 = vsel %vm1272, %v1597, %v1598
        %v1600 = vsel %vm1274, %v1593, %v1594
        %v1601 = vsel %vm1276, %v1595, %v1596
        %v1602 = vsel %vm1278, %v1600, %v1601
        %v1603 = vsel %vm1280, %v1599, %v1602
        %v1605 = vadd.f32 %v1285, %v1603
        %1606 = vst [vmem:[#allocation3] sm:$0xff] %v1605
        %p1607 = scmp.eq.s32.totalorder %s23, 1
        // Predicated region
        $region57: #{tpu_custom_call.1} parent=35 // pred_check
          %p1608 = pneg %p1607
        $region58: #{tpu_custom_call.1} parent=35 // pred_check_branch
          %1610 = sbr.rel (%p1608) target = $region60
        $region59: #{tpu_custom_call.1} parent=35 // pred_region
          %v1611 = vld [vmem:[#allocation3] sm:$0xff]
          %vm1612 = vcmp.gt.f32.partialorder %v1611, 0.0
          %v1613 = vrcp.pop %v1611
          %v1614 = vmul.f32 %v1611, %v1613
          %v1615 = vsub.f32 1.0, %v1614
          %v1616 = vmul.f32 %v1613, %v1615
          %v1617 = vadd.f32 %v1613, %v1616
          %vm1618 = vweird.f32 %v1611
          %vm1619 = vweird.f32 %v1613
          %vm1620 = vmor %vm1618, %vm1619
          %v1621 = vsel %vm1620, %v1613, %v1617
          %v1622 = vand.u32 2147483647, %v1611
          %vm1623 = vcmp.eq.f32.partialorder %v1622, 8.507059e+37
          %v1624 = vand.u32 %v1611, 2147483648
          %v1625 = vor.u32 1.1754944e-38, %v1624
          %v1626 = vsel %vm1623, %v1625, %v1621
          %v1627 = vmul.f32 1.0, %v1626
          %v1628 = vsel %vm1612, %v1627, 0.0
          %v1629 = vld [vmem:[#allocation2] sm:$0xff]
          %v1630 = vsub.f32 %v1629, %v1611
          %v1631 = vmul.f32 %v562, %v1628
          %v1632 = vmul.f32 %v1631, %v1630
          %v1633 = vadd.f32 %v562, %v1632
          %1634 = vst [vmem:[#allocation12] sm:$0xff] %v1633
        $region60: #{tpu_custom_call.1} parent=35 // pred_fallthru
          _
        // Predicated region
        $region61: #{tpu_custom_call.1} parent=35 // pred_check
          %p1635 = pneg %p135
        $region62: #{tpu_custom_call.1} parent=35 // pred_check_branch
          %1637 = sbr.rel (%p1635) target = $region64
        $region63: #{tpu_custom_call.1} parent=35 // pred_region
          %1639 = vsyncadd [#allocation6], 0
          %s1641 = sshll.u32 [#allocation12], 4
          %s1642 = int_to_ptr.vmem [resolvable:$true] %s1641
          %s1643 = sshll.u32 %s4, 4
          %s1644 = int_to_ptr.hbm [resolvable:$true] %s1643
          %1646 = dma.vmem_to_hbm [thread:$0]  %s1642, 128, %s1644, [#allocation6]
        $region64: #{tpu_custom_call.1} parent=35 // pred_fallthru
          _
        // Predicated region
        $region65: #{tpu_custom_call.1} parent=35 // pred_check
          %p1647 = pneg %p135
        $region66: #{tpu_custom_call.1} parent=35 // pred_check_branch
          %1649 = sbr.rel (%p1647) target = $region68
        $region67: #{tpu_custom_call.1} parent=35 // pred_region
          %1651 = dma.done [#allocation6], 128
        $region68: #{tpu_custom_call.1} parent=35 // pred_fallthru
          _
      $region36: #{tpu_custom_call.1} parent=5 // pred_fallthru
        _
      %p1652 = scmp.le.s32.totalorder 2, %s18
      // Predicated region
      $region69: #{tpu_custom_call.1} parent=5 // pred_check
        %p1653 = pneg %p1652
      $region70: #{tpu_custom_call.1} parent=5 // pred_check_branch
        %1655 = sbr.rel (%p1653) target = $region72
      $region71: #{tpu_custom_call.1} parent=5 // pred_region
        %s1656 = ssub.s32 %s18, 2
      $region72: #{tpu_custom_call.1} parent=5 // pred_fallthru
        _
    $region6: #{tpu_custom_call.1} parent=1 // loop_footer
      %s22 = sadd.s32 1, %s18
    $region7: #{tpu_custom_call.1} parent=1 // loop_footer_branch
      %17 = sbr.rel target = $region3
    $region8: #{tpu_custom_call.1} parent=1 // loop_exit
      _
    %1657 = vsyncpa [#allocation5], 1
    %s1658 = scalar_lea.sflag [#allocation5], 1
    %1659 = vsyncpa %s1658, 1
    %1660 = vsyncpa [#allocation8], 1
    %s1661 = scalar_lea.sflag [#allocation8], 1
    %1662 = vsyncpa %s1661, 1
    %1663 = vsyncpa [#allocation11], 1
    %s1664 = scalar_lea.sflag [#allocation11], 1
    %1665 = vsyncpa %s1664, 1
    %1666 = vsyncpa [#allocation6], 1
    %s1667 = scalar_lea.sflag [#allocation6], 1
    %1668 = vsyncpa %s1667, 1

</llo_original>
